<compile_context>
chip_gen: v6e
topology: v6e:2x2x1
jax: 0.10.0
libtpu: 0.0.40
codegen_flags: <defaults>
</compile_context>

<pallas_src>
import jax
import jax.numpy as jnp
import numpy as np
from jax.experimental import pallas as pl
from jax.experimental.pallas import tpu as pltpu

LANE = 128


# ----------------------------------------------------------------------------
# Fused Pallas kernel: all TemporalBlocks + Linear head in one invocation
# ----------------------------------------------------------------------------
def make_fused_tcn_kernel(B, T, K, meta, cpad):
    """meta: list of dicts per block with keys 'dilation', 'has_ds'."""
    M = B * T
    # Static set of non-zero causal shifts used anywhere in the network.
    shifts = sorted(
        {(K - 1 - k) * m["dilation"] for m in meta for k in range(K)} - {0}
    )

    def kernel(x_ref, e_ref, *refs):
        o_ref = refs[-1]
        w = refs[:-1]

        # --- hoisted per-shift causal masks (built once, reused by every conv)
        t_in = jax.lax.broadcasted_iota(jnp.int32, (M, 1), 0) % T
        masks = {s: (t_in >= s) for s in shifts}

        def causal_conv(h, wf_ref, b_ref, dilation):
            # Build (M, K*cpad) slab of causally shifted inputs -> one MXU push
            # with a K*128-deep contraction (fills the 256x256 MXU at K=2).
            taps = []
            for k in range(K):
                shift = (K - 1 - k) * dilation
                if shift == 0:
                    taps.append(h)
                else:
                    rolled = pltpu.roll(h, shift, axis=0)
                    # rows with t < shift are zero (causal left-pad); this also
                    # masks cross-batch leakage from the circular roll.
                    taps.append(jnp.where(masks[shift], rolled, 0.0))
            slab = taps[0] if K == 1 else jnp.concatenate(taps, axis=1)
            return (
                jnp.dot(
                    slab.astype(jnp.bfloat16),
                    wf_ref[...],  # bf16 weight slab
                    preferred_element_type=jnp.float32,
                )
                + b_ref[...]  # f32 bias
            )

        # Widen (M, cin) input to (M, cpad) lanes with an exact identity matmul
        # (keeps host-side input un-padded / HBM traffic O(cin)).
        h = jnp.dot(x_ref[...], e_ref[...], preferred_element_type=jnp.float32)

        i = 0
        for m in meta:
            d = m["dilation"]
            # conv1 -> chomp -> relu -> dropout(identity)
            h1 = jnp.maximum(causal_conv(h, w[i], w[i + 1], d), 0.0)
            # conv2 -> chomp -> relu -> dropout(identity)
            h2 = jnp.maximum(causal_conv(h1, w[i + 2], w[i + 3], d), 0.0)
            i += 4
            if m["has_ds"]:
                res = (
                    jnp.dot(
                        h.astype(jnp.bfloat16),
                        w[i][...],
                        preferred_element_type=jnp.float32,
                    )
                    + w[i + 1][...]
                )
                i += 2
            else:
                res = h
            h = jnp.maximum(h2 + res, 0.0)

        # Linear head on the LAST timestep of each sample only (no sel matmul).
        h_last = h.reshape(B, T, cpad)[:, T - 1, :]          # (B, cpad)
        # Note: B=2 output rows -> masked sublane store; trivial at this size.
        o_ref[...] = (
            jnp.dot(
                h_last.astype(jnp.bfloat16),
                w[i][...],
                preferred_element_type=jnp.float32,
            )
            + w[i + 1][...]
        ).astype(o_ref.dtype)

    return kernel


# ----------------------------------------------------------------------------
# Host-side parameter prep: pad to lane-dense widths, fold K taps into rows,
# store matmul operands as bf16 (biases stay f32).
# ----------------------------------------------------------------------------
def prepare_fused_params(block_params, lin_params, K, cpad):
    def pad_bias(b):
        return jnp.zeros((1, cpad), jnp.float32).at[:, : b.shape[1]].set(
            b.astype(jnp.float32)
        )

    def fold_conv(wkio):  # (K, Cin, Cout) -> (K*cpad, cpad) bf16
        kk, ci, co = wkio.shape
        wp = jnp.zeros((kk, cpad, cpad), jnp.float32).at[:, :ci, :co].set(wkio)
        return wp.reshape(kk * cpad, cpad).astype(jnp.bfloat16)

    def pad_mat(wio):  # (Cin, Cout) -> (cpad, cpad) bf16
        return (
            jnp.zeros((cpad, cpad), jnp.float32)
            .at[: wio.shape[0], : wio.shape[1]]
            .set(wio)
            .astype(jnp.bfloat16)
        )

    flat, meta = [], []
    for p in block_params:
        flat += [fold_conv(p["w1"]), pad_bias(p["b1"]),
                 fold_conv(p["w2"]), pad_bias(p["b2"])]
        has_ds = p["wd"] is not None
        if has_ds:
            flat += [pad_mat(p["wd"]), pad_bias(p["bd"])]
        meta.append(dict(dilation=p["dilation"], has_ds=has_ds))

    wl, bl = lin_params
    flat += [pad_mat(wl), pad_bias(bl)]
    return flat, meta


# ----------------------------------------------------------------------------
# weight_norm fold: effective weight = g * v / ||v||  (per output channel)
# PyTorch stores weight_v (Cout,Cin,K) and weight_g (Cout,1,1); here v is laid
# out as (K, Cin, Cout) and g as (Cout,).
# ----------------------------------------------------------------------------
def fold_weight_norm(v, g):
    norm = jnp.sqrt(jnp.sum(v * v, axis=(0, 1), keepdims=True))  # (1,1,Cout)
    return v * (g[None, None, :] / norm)


# ----------------------------------------------------------------------------
# Wrapper: one pallas_call for the whole forward pass
# ----------------------------------------------------------------------------
def tcn_forward(x, block_params, lin_params, kernel_size):
    """x: (B, T, input_size) -> (B, output_size)."""
    B, T, cin = x.shape
    out_size = lin_params[0].shape[1]

    dims = [cin, out_size]
    for p in block_params:
        dims += [p["w1"].shape[1], p["w1"].shape[2]]
    cpad = max(LANE, -(-max(dims) // LANE) * LANE)

    flat, meta = prepare_fused_params(block_params, lin_params, kernel_size, cpad)

    M = B * T
    x_flat = x.astype(jnp.float32).reshape(M, cin)            # no host lane-pad
    e = jnp.eye(cin, cpad, dtype=jnp.float32)                 # in-kernel widener

    kernel = make_fused_tcn_kernel(B, T, kernel_size, meta, cpad)

    out_padded = pl.pallas_call(
        kernel,
        out_shape=jax.ShapeDtypeStruct((B, cpad), jnp.float32),
    )(x_flat, e, *flat)
    return out_padded[:, :out_size]


# ----------------------------------------------------------------------------
# Deterministic parameter construction (synthetic, matches module shapes,
# explicitly goes through the weight_norm fold for conv1/conv2).
# ----------------------------------------------------------------------------
def init_params(key, input_size, num_channels, kernel_size, output_size):
    block_params = []
    cin = input_size
    for i, cout in enumerate(num_channels):
        key, k1, k2, k3, k4, k5, k6 = jax.random.split(key, 7)
        # weight_norm parametrization: direction v + per-out-channel gain g.
        # PyTorch init sets g = ||v||, so the effective weight equals v here,
        # but we still route through the fold to document checkpoint mapping.
        v1 = jax.random.normal(k1, (kernel_size, cin, cout), jnp.float32) * 0.01
        g1 = jnp.sqrt(jnp.sum(v1 * v1, axis=(0, 1)))
        w1 = fold_weight_norm(v1, g1)
        b1 = jax.random.normal(k2, (1, cout), jnp.float32) * 0.01
        v2 = jax.random.normal(k3, (kernel_size, cout, cout), jnp.float32) * 0.01
        g2 = jnp.sqrt(jnp.sum(v2 * v2, axis=(0, 1)))
        w2 = fold_weight_norm(v2, g2)
        b2 = jax.random.normal(k4, (1, cout), jnp.float32) * 0.01
        if cin != cout:
            wd = jax.random.normal(k5, (cin, cout), jnp.float32) * 0.01
            bd = jax.random.normal(k6, (1, cout), jnp.float32) * 0.01
        else:
            wd, bd = None, None
        block_params.append(
            dict(w1=w1, b1=b1, w2=w2, b2=b2, wd=wd, bd=bd, dilation=2 ** i)
        )
        cin = cout
    key, kl1, kl2 = jax.random.split(key, 3)
    wl = jax.random.normal(kl1, (cin, output_size), jnp.float32) * 0.1
    bl = jax.random.normal(kl2, (1, output_size), jnp.float32) * 0.1
    return block_params, (wl, bl)


# ----------------------------------------------------------------------------
# Pure-JAX f32 reference (for correctness check)
# ----------------------------------------------------------------------------
def tcn_reference(x, block_params, lin_params, K):
    def conv(inp, w, b, d):
        T = inp.shape[1]
        out = jnp.zeros((inp.shape[0], T, w.shape[2]), jnp.float32) + b
        for k in range(K):
            s = (K - 1 - k) * d
            xs = jnp.pad(inp, ((0, 0), (s, 0), (0, 0)))[:, :T, :]
            out = out + jnp.einsum("btc,cd->btd", xs, w[k])
        return out

    h = x
    for p in block_params:
        d = p["dilation"]
        h1 = jax.nn.relu(conv(h, p["w1"], p["b1"], d))
        h2 = jax.nn.relu(conv(h1, p["w2"], p["b2"], d))
        if p["wd"] is None:
            res = h
        else:
            res = jnp.einsum("btc,cd->btd", h, p["wd"]) + p["bd"]
        h = jax.nn.relu(h2 + res)
    wl, bl = lin_params
    return h[:, -1, :] @ wl + bl


# ----------------------------------------------------------------------------
if __name__ == "__main__":
    key = jax.random.PRNGKey(0)
    B, T = 2, 8
    input_size, output_size = 4, 3
    num_channels = [8, 16]
    kernel_size = 2
    # dropout=0.2 in the module -> identity at inference time.

    key, kx, kp = jax.random.split(key, 3)
    # Model input (batch, seq_len, features); PyTorch forward transposes internally.
    x = jax.random.normal(kx, (B, T, input_size), jnp.float32)
    block_params, lin_params = init_params(
        kp, input_size, num_channels, kernel_size, output_size
    )

    out = tcn_forward(x, block_params, lin_params, kernel_size)
    out = jax.block_until_ready(out)

    ref = tcn_reference(x, block_params, lin_params, kernel_size)
    assert out.shape == (B, output_size)
    # bf16 MXU operands -> loosen tolerances vs the f32 reference.
    np.testing.assert_allclose(np.asarray(out), np.asarray(ref), rtol=1e-2, atol=1e-2)

    print("KERNEL_OK")
</pallas_src>

<mosaic_0001>
module attributes {stable_mosaic.version = 11 : i64} {
  func.func @kernel(%arg0: memref<16x4xf32, #tpu.memory_space<vmem>>, %arg1: memref<4x128xf32, #tpu.memory_space<vmem>>, %arg2: memref<256x128xbf16, #tpu.memory_space<vmem>>, %arg3: memref<1x128xf32, #tpu.memory_space<vmem>>, %arg4: memref<256x128xbf16, #tpu.memory_space<vmem>>, %arg5: memref<1x128xf32, #tpu.memory_space<vmem>>, %arg6: memref<128x128xbf16, #tpu.memory_space<vmem>>, %arg7: memref<1x128xf32, #tpu.memory_space<vmem>>, %arg8: memref<256x128xbf16, #tpu.memory_space<vmem>>, %arg9: memref<1x128xf32, #tpu.memory_space<vmem>>, %arg10: memref<256x128xbf16, #tpu.memory_space<vmem>>, %arg11: memref<1x128xf32, #tpu.memory_space<vmem>>, %arg12: memref<128x128xbf16, #tpu.memory_space<vmem>>, %arg13: memref<1x128xf32, #tpu.memory_space<vmem>>, %arg14: memref<128x128xbf16, #tpu.memory_space<vmem>>, %arg15: memref<1x128xf32, #tpu.memory_space<vmem>>, %arg16: memref<2x128xf32, #tpu.memory_space<vmem>>) attributes {dimension_semantics = [], scalar_prefetch = 0 : i64, scratch_operands = 0 : i64, tpu.core_type = #tpu.core_type<tc>} {
    %0 = tpu.iota {dimensions = array<i32: 0>} : vector<16x1xi32>
    %c8_i32 = arith.constant 8 : i32
    %c0_i32 = arith.constant 0 : i32
    %1 = arith.cmpi eq, %c8_i32, %c0_i32 : i32
    %c1_i32 = arith.constant 1 : i32
    %2 = arith.select %1, %c1_i32, %c8_i32 : i32
    %3 = vector.broadcast %2 : i32 to vector<16x1xi32>
    %4 = arith.remsi %0, %3 : vector<16x1xi32>
    %c0_i32_0 = arith.constant 0 : i32
    %5 = vector.broadcast %c0_i32_0 : i32 to vector<16x1xi32>
    %6 = arith.cmpi ne, %4, %5 : vector<16x1xi32>
    %c0_i32_1 = arith.constant 0 : i32
    %7 = vector.broadcast %c0_i32_1 : i32 to vector<16x1xi32>
    %8 = arith.cmpi slt, %4, %7 : vector<16x1xi32>
    %c0_i32_2 = arith.constant 0 : i32
    %9 = arith.cmpi slt, %2, %c0_i32_2 : i32
    %10 = vector.broadcast %9 : i1 to vector<16x1xi1>
    %11 = vector.broadcast %10 : vector<16x1xi1> to vector<16x1xi1>
    %12 = arith.xori %8, %11 : vector<16x1xi1>
    %13 = arith.andi %12, %6 : vector<16x1xi1>
    %14 = vector.broadcast %2 : i32 to vector<16x1xi32>
    %15 = arith.addi %4, %14 : vector<16x1xi32>
    %16 = arith.select %13, %15, %4 : vector<16x1xi1>, vector<16x1xi32>
    %c1_i32_3 = arith.constant 1 : i32
    %17 = vector.broadcast %c1_i32_3 : i32 to vector<16x1xi32>
    %18 = arith.cmpi sge, %16, %17 : vector<16x1xi32>
    %c2_i32 = arith.constant 2 : i32
    %19 = vector.broadcast %c2_i32 : i32 to vector<16x1xi32>
    %20 = arith.cmpi sge, %16, %19 : vector<16x1xi32>
    %c0 = arith.constant 0 : index
    %c0_4 = arith.constant 0 : index
    %21 = vector.load %arg0[%c0, %c0_4] : memref<16x4xf32, #tpu.memory_space<vmem>>, vector<16x4xf32>
    %c0_5 = arith.constant 0 : index
    %c0_6 = arith.constant 0 : index
    %22 = vector.load %arg1[%c0_5, %c0_6] : memref<4x128xf32, #tpu.memory_space<vmem>>, vector<4x128xf32>
    %cst = arith.constant dense<0.000000e+00> : vector<16x128xf32>
    %23 = tpu.matmul %21, %22, %cst {dimension_numbers = #tpu.dot_dimension_numbers<[1], [0], [0], [1], [0, 0, 1, 1], [], []>} : vector<16x4xf32>, vector<4x128xf32>, vector<16x128xf32> -> vector<16x128xf32>
    %c1_i32_7 = arith.constant 1 : i32
    %24 = tpu.dynamic_rotate %23 by %c1_i32_7 dim 0 : vector<16x128xf32>, i32 -> vector<16x128xf32>
    %cst_8 = arith.constant 0.000000e+00 : f32
    %25 = vector.shape_cast %18 : vector<16x1xi1> to vector<16x1xi1>
    %26 = vector.broadcast %25 : vector<16x1xi1> to vector<16x128xi1>
    %27 = vector.broadcast %cst_8 : f32 to vector<16x128xf32>
    %28 = arith.select %26, %24, %27 : vector<16x128xi1>, vector<16x128xf32>
    %29 = tpu.concatenate %28, %23 in 1 : vector<16x128xf32>, vector<16x128xf32> -> vector<16x256xf32>
    %30 = arith.truncf %29 : vector<16x256xf32> to vector<16x256xbf16>
    %c0_9 = arith.constant 0 : index
    %c0_10 = arith.constant 0 : index
    %31 = vector.load %arg2[%c0_9, %c0_10] : memref<256x128xbf16, #tpu.memory_space<vmem>>, vector<256x128xbf16>
    %cst_11 = arith.constant dense<0.000000e+00> : vector<16x128xf32>
    %32 = tpu.matmul %30, %31, %cst_11 {dimension_numbers = #tpu.dot_dimension_numbers<[1], [0], [0], [1], [0, 0, 1, 1], [], []>} : vector<16x256xbf16>, vector<256x128xbf16>, vector<16x128xf32> -> vector<16x128xf32>
    %c0_12 = arith.constant 0 : index
    %c0_13 = arith.constant 0 : index
    %33 = vector.load %arg3[%c0_12, %c0_13] : memref<1x128xf32, #tpu.memory_space<vmem>>, vector<1x128xf32>
    %34 = vector.broadcast %33 : vector<1x128xf32> to vector<16x128xf32>
    %35 = arith.addf %32, %34 : vector<16x128xf32>
    %cst_14 = arith.constant 0.000000e+00 : f32
    %36 = vector.broadcast %cst_14 : f32 to vector<16x128xf32>
    %37 = arith.maximumf %35, %36 : vector<16x128xf32>
    %c1_i32_15 = arith.constant 1 : i32
    %38 = tpu.dynamic_rotate %37 by %c1_i32_15 dim 0 : vector<16x128xf32>, i32 -> vector<16x128xf32>
    %cst_16 = arith.constant 0.000000e+00 : f32
    %39 = vector.shape_cast %18 : vector<16x1xi1> to vector<16x1xi1>
    %40 = vector.broadcast %39 : vector<16x1xi1> to vector<16x128xi1>
    %41 = vector.broadcast %cst_16 : f32 to vector<16x128xf32>
    %42 = arith.select %40, %38, %41 : vector<16x128xi1>, vector<16x128xf32>
    %43 = tpu.concatenate %42, %37 in 1 : vector<16x128xf32>, vector<16x128xf32> -> vector<16x256xf32>
    %44 = arith.truncf %43 : vector<16x256xf32> to vector<16x256xbf16>
    %c0_17 = arith.constant 0 : index
    %c0_18 = arith.constant 0 : index
    %45 = vector.load %arg4[%c0_17, %c0_18] : memref<256x128xbf16, #tpu.memory_space<vmem>>, vector<256x128xbf16>
    %cst_19 = arith.constant dense<0.000000e+00> : vector<16x128xf32>
    %46 = tpu.matmul %44, %45, %cst_19 {dimension_numbers = #tpu.dot_dimension_numbers<[1], [0], [0], [1], [0, 0, 1, 1], [], []>} : vector<16x256xbf16>, vector<256x128xbf16>, vector<16x128xf32> -> vector<16x128xf32>
    %c0_20 = arith.constant 0 : index
    %c0_21 = arith.constant 0 : index
    %47 = vector.load %arg5[%c0_20, %c0_21] : memref<1x128xf32, #tpu.memory_space<vmem>>, vector<1x128xf32>
    %48 = vector.broadcast %47 : vector<1x128xf32> to vector<16x128xf32>
    %49 = arith.addf %46, %48 : vector<16x128xf32>
    %cst_22 = arith.constant 0.000000e+00 : f32
    %50 = vector.broadcast %cst_22 : f32 to vector<16x128xf32>
    %51 = arith.maximumf %49, %50 : vector<16x128xf32>
    %52 = arith.truncf %23 : vector<16x128xf32> to vector<16x128xbf16>
    %c0_23 = arith.constant 0 : index
    %c0_24 = arith.constant 0 : index
    %53 = vector.load %arg6[%c0_23, %c0_24] : memref<128x128xbf16, #tpu.memory_space<vmem>>, vector<128x128xbf16>
    %cst_25 = arith.constant dense<0.000000e+00> : vector<16x128xf32>
    %54 = tpu.matmul %52, %53, %cst_25 {dimension_numbers = #tpu.dot_dimension_numbers<[1], [0], [0], [1], [0, 0, 1, 1], [], []>} : vector<16x128xbf16>, vector<128x128xbf16>, vector<16x128xf32> -> vector<16x128xf32>
    %c0_26 = arith.constant 0 : index
    %c0_27 = arith.constant 0 : index
    %55 = vector.load %arg7[%c0_26, %c0_27] : memref<1x128xf32, #tpu.memory_space<vmem>>, vector<1x128xf32>
    %56 = vector.broadcast %55 : vector<1x128xf32> to vector<16x128xf32>
    %57 = arith.addf %54, %56 : vector<16x128xf32>
    %58 = arith.addf %51, %57 : vector<16x128xf32>
    %cst_28 = arith.constant 0.000000e+00 : f32
    %59 = vector.broadcast %cst_28 : f32 to vector<16x128xf32>
    %60 = arith.maximumf %58, %59 : vector<16x128xf32>
    %c2_i32_29 = arith.constant 2 : i32
    %61 = tpu.dynamic_rotate %60 by %c2_i32_29 dim 0 : vector<16x128xf32>, i32 -> vector<16x128xf32>
    %cst_30 = arith.constant 0.000000e+00 : f32
    %62 = vector.shape_cast %20 : vector<16x1xi1> to vector<16x1xi1>
    %63 = vector.broadcast %62 : vector<16x1xi1> to vector<16x128xi1>
    %64 = vector.broadcast %cst_30 : f32 to vector<16x128xf32>
    %65 = arith.select %63, %61, %64 : vector<16x128xi1>, vector<16x128xf32>
    %66 = tpu.concatenate %65, %60 in 1 : vector<16x128xf32>, vector<16x128xf32> -> vector<16x256xf32>
    %67 = arith.truncf %66 : vector<16x256xf32> to vector<16x256xbf16>
    %c0_31 = arith.constant 0 : index
    %c0_32 = arith.constant 0 : index
    %68 = vector.load %arg8[%c0_31, %c0_32] : memref<256x128xbf16, #tpu.memory_space<vmem>>, vector<256x128xbf16>
    %cst_33 = arith.constant dense<0.000000e+00> : vector<16x128xf32>
    %69 = tpu.matmul %67, %68, %cst_33 {dimension_numbers = #tpu.dot_dimension_numbers<[1], [0], [0], [1], [0, 0, 1, 1], [], []>} : vector<16x256xbf16>, vector<256x128xbf16>, vector<16x128xf32> -> vector<16x128xf32>
    %c0_34 = arith.constant 0 : index
    %c0_35 = arith.constant 0 : index
    %70 = vector.load %arg9[%c0_34, %c0_35] : memref<1x128xf32, #tpu.memory_space<vmem>>, vector<1x128xf32>
    %71 = vector.broadcast %70 : vector<1x128xf32> to vector<16x128xf32>
    %72 = arith.addf %69, %71 : vector<16x128xf32>
    %cst_36 = arith.constant 0.000000e+00 : f32
    %73 = vector.broadcast %cst_36 : f32 to vector<16x128xf32>
    %74 = arith.maximumf %72, %73 : vector<16x128xf32>
    %c2_i32_37 = arith.constant 2 : i32
    %75 = tpu.dynamic_rotate %74 by %c2_i32_37 dim 0 : vector<16x128xf32>, i32 -> vector<16x128xf32>
    %cst_38 = arith.constant 0.000000e+00 : f32
    %76 = vector.shape_cast %20 : vector<16x1xi1> to vector<16x1xi1>
    %77 = vector.broadcast %76 : vector<16x1xi1> to vector<16x128xi1>
    %78 = vector.broadcast %cst_38 : f32 to vector<16x128xf32>
    %79 = arith.select %77, %75, %78 : vector<16x128xi1>, vector<16x128xf32>
    %80 = tpu.concatenate %79, %74 in 1 : vector<16x128xf32>, vector<16x128xf32> -> vector<16x256xf32>
    %81 = arith.truncf %80 : vector<16x256xf32> to vector<16x256xbf16>
    %c0_39 = arith.constant 0 : index
    %c0_40 = arith.constant 0 : index
    %82 = vector.load %arg10[%c0_39, %c0_40] : memref<256x128xbf16, #tpu.memory_space<vmem>>, vector<256x128xbf16>
    %cst_41 = arith.constant dense<0.000000e+00> : vector<16x128xf32>
    %83 = tpu.matmul %81, %82, %cst_41 {dimension_numbers = #tpu.dot_dimension_numbers<[1], [0], [0], [1], [0, 0, 1, 1], [], []>} : vector<16x256xbf16>, vector<256x128xbf16>, vector<16x128xf32> -> vector<16x128xf32>
    %c0_42 = arith.constant 0 : index
    %c0_43 = arith.constant 0 : index
    %84 = vector.load %arg11[%c0_42, %c0_43] : memref<1x128xf32, #tpu.memory_space<vmem>>, vector<1x128xf32>
    %85 = vector.broadcast %84 : vector<1x128xf32> to vector<16x128xf32>
    %86 = arith.addf %83, %85 : vector<16x128xf32>
    %cst_44 = arith.constant 0.000000e+00 : f32
    %87 = vector.broadcast %cst_44 : f32 to vector<16x128xf32>
    %88 = arith.maximumf %86, %87 : vector<16x128xf32>
    %89 = arith.truncf %60 : vector<16x128xf32> to vector<16x128xbf16>
    %c0_45 = arith.constant 0 : index
    %c0_46 = arith.constant 0 : index
    %90 = vector.load %arg12[%c0_45, %c0_46] : memref<128x128xbf16, #tpu.memory_space<vmem>>, vector<128x128xbf16>
    %cst_47 = arith.constant dense<0.000000e+00> : vector<16x128xf32>
    %91 = tpu.matmul %89, %90, %cst_47 {dimension_numbers = #tpu.dot_dimension_numbers<[1], [0], [0], [1], [0, 0, 1, 1], [], []>} : vector<16x128xbf16>, vector<128x128xbf16>, vector<16x128xf32> -> vector<16x128xf32>
    %c0_48 = arith.constant 0 : index
    %c0_49 = arith.constant 0 : index
    %92 = vector.load %arg13[%c0_48, %c0_49] : memref<1x128xf32, #tpu.memory_space<vmem>>, vector<1x128xf32>
    %93 = vector.broadcast %92 : vector<1x128xf32> to vector<16x128xf32>
    %94 = arith.addf %91, %93 : vector<16x128xf32>
    %95 = arith.addf %88, %94 : vector<16x128xf32>
    %cst_50 = arith.constant 0.000000e+00 : f32
    %96 = vector.broadcast %cst_50 : f32 to vector<16x128xf32>
    %97 = arith.maximumf %95, %96 : vector<16x128xf32>
    %98 = vector.shape_cast %97 : vector<16x128xf32> to vector<2x8x128xf32>
    %99 = vector.extract_strided_slice %98 {offsets = [0, 7, 0], sizes = [2, 1, 128], strides = [1, 1, 1]} : vector<2x8x128xf32> to vector<2x1x128xf32>
    %100 = vector.shape_cast %99 : vector<2x1x128xf32> to vector<2x128xf32>
    %101 = arith.truncf %100 : vector<2x128xf32> to vector<2x128xbf16>
    %c0_51 = arith.constant 0 : index
    %c0_52 = arith.constant 0 : index
    %102 = vector.load %arg14[%c0_51, %c0_52] : memref<128x128xbf16, #tpu.memory_space<vmem>>, vector<128x128xbf16>
    %cst_53 = arith.constant dense<0.000000e+00> : vector<2x128xf32>
    %103 = tpu.matmul %101, %102, %cst_53 {dimension_numbers = #tpu.dot_dimension_numbers<[1], [0], [0], [1], [0, 0, 1, 1], [], []>} : vector<2x128xbf16>, vector<128x128xbf16>, vector<2x128xf32> -> vector<2x128xf32>
    %c0_54 = arith.constant 0 : index
    %c0_55 = arith.constant 0 : index
    %104 = vector.load %arg15[%c0_54, %c0_55] : memref<1x128xf32, #tpu.memory_space<vmem>>, vector<1x128xf32>
    %105 = vector.broadcast %104 : vector<1x128xf32> to vector<2x128xf32>
    %106 = arith.addf %103, %105 : vector<2x128xf32>
    %c0_56 = arith.constant 0 : index
    %c0_57 = arith.constant 0 : index
    %107 = vector.load %arg16[%c0_56, %c0_57] : memref<2x128xf32, #tpu.memory_space<vmem>>, vector<2x128xf32>
    tpu.vector_store %arg16[%c0_56, %c0_57], %106 {strides = array<i32>} : memref<2x128xf32, #tpu.memory_space<vmem>>, vector<2x128xf32>,
    return
  }
}

</mosaic_0001>

<llo_original>
// kernel: tpu_custom_call.1
$region0: #{tpu_custom_call.1}
  #allocation0 [shape = 'u32[]', space=smem, size = 0x4, offset = 0x4, fixed_abs, tag = 'smem constant byte address 0x4 - core index']
  #allocation1 [shape = 'u32[144,128]{1,0:T(1,128)}', space=vmem, size = 0x12000, scoped, tag = 'internal scratch']
  %s0 = inlined_call_operand.vmem [shape: f32[16,4], index: 0, kind: input, shape index: {}]
  %s1 = inlined_call_operand.vmem [shape: f32[4,128], index: 1, kind: input, shape index: {}]
  %s2 = inlined_call_operand.hbm [shape: bf16[256,128], index: 2, kind: input, shape index: {}]
  %s3 = inlined_call_operand.vmem [shape: f32[1,128], index: 3, kind: input, shape index: {}]
  %s4 = inlined_call_operand.hbm [shape: bf16[256,128], index: 4, kind: input, shape index: {}]
  %s5 = inlined_call_operand.vmem [shape: f32[1,128], index: 5, kind: input, shape index: {}]
  %s6 = inlined_call_operand.hbm [shape: bf16[128,128], index: 6, kind: input, shape index: {}]
  %s7 = inlined_call_operand.vmem [shape: f32[1,128], index: 7, kind: input, shape index: {}]
  %s8 = inlined_call_operand.hbm [shape: bf16[256,128], index: 8, kind: input, shape index: {}]
  %s9 = inlined_call_operand.vmem [shape: f32[1,128], index: 9, kind: input, shape index: {}]
  %s10 = inlined_call_operand.hbm [shape: bf16[256,128], index: 10, kind: input, shape index: {}]
  %s11 = inlined_call_operand.vmem [shape: f32[1,128], index: 11, kind: input, shape index: {}]
  %s12 = inlined_call_operand.hbm [shape: bf16[128,128], index: 12, kind: input, shape index: {}]
  %s13 = inlined_call_operand.vmem [shape: f32[1,128], index: 13, kind: input, shape index: {}]
  %s14 = inlined_call_operand.hbm [shape: bf16[128,128], index: 14, kind: input, shape index: {}]
  %s15 = inlined_call_operand.vmem [shape: f32[1,128], index: 15, kind: input, shape index: {}]
  %s16 = inlined_call_operand.hbm [shape: f32[2,128], index: 16, kind: output, shape index: {}]
  %s17 = sld [smem:[#allocation0]]
  $region102: #{tpu_custom_call.1} parent=0
    _
  %s19 = ssub.s32 1, %s17
  %s20 = scalar_select 0, %s19, %s17
  $region1: #{tpu_custom_call.1} parent=0
    #allocation2 [shape = 'u8[65536]{0}', space=vmem, size = 0x10000, scoped, tag = 'input window, operand 2, single buffered']
    #allocation3 [shape = 's32[1]{0}', space=sflag, size = 0x4, scoped, tag = 'scoped memory for tpu_custom_call.1']
    #allocation4 [shape = 's32[1]{0}', space=sflag, size = 0x4, scoped, tag = 'scoped memory for tpu_custom_call.1']
    #allocation5 [shape = 'u8[65536]{0}', space=vmem, size = 0x10000, scoped, tag = 'input window, operand 4, single buffered']
    #allocation6 [shape = 's32[1]{0}', space=sflag, size = 0x4, scoped, tag = 'scoped memory for tpu_custom_call.1']
    #allocation7 [shape = 'u8[32768]{0}', space=vmem, size = 0x8000, scoped, tag = 'input window, operand 6, single buffered']
    #allocation8 [shape = 'u8[65536]{0}', space=vmem, size = 0x10000, scoped, tag = 'input window, operand 8, single buffered']
    #allocation9 [shape = 's32[1]{0}', space=sflag, size = 0x4, scoped, tag = 'scoped memory for tpu_custom_call.1']
    #allocation10 [shape = 'u8[65536]{0}', space=vmem, size = 0x10000, scoped, tag = 'input window, operand 10, single buffered']
    #allocation11 [shape = 'u8[32768]{0}', space=vmem, size = 0x8000, scoped, tag = 'input window, operand 12, single buffered']
    #allocation12 [shape = 's32[1]{0}', space=sflag, size = 0x4, scoped, tag = 'scoped memory for tpu_custom_call.1']
    #allocation13 [shape = 'u8[32768]{0}', space=vmem, size = 0x8000, scoped, tag = 'input window, operand 14, single buffered']
    #allocation14 [shape = 'u8[1024]{0}', space=vmem, size = 0x400, scoped, tag = 'output window, operand 0, single buffered']
    %21 = vsyncpa [#allocation3], 0
    %22 = vsyncpa [#allocation6], 0
    %23 = vsyncpa [#allocation9], 0
    %24 = vsyncpa [#allocation12], 0
    %25 = vsyncpa [#allocation4], 0
    // Predicated region
    $region2: #{tpu_custom_call.1} parent=1 // pred_check
      _
    $region3: #{tpu_custom_call.1} parent=1 // pred_check_branch
      %27 = sbr.rel (0) target = $region5
    $region4: #{tpu_custom_call.1} parent=1 // pred_region
      _
    $region5: #{tpu_custom_call.1} parent=1 // pred_fallthru
      _
    // Predicated region
    $region6: #{tpu_custom_call.1} parent=1 // pred_check
      _
    $region7: #{tpu_custom_call.1} parent=1 // pred_check_branch
      %29 = sbr.rel (0) target = $region9
    $region8: #{tpu_custom_call.1} parent=1 // pred_region
      _
    $region9: #{tpu_custom_call.1} parent=1 // pred_fallthru
      _
    // Predicated region
    $region10: #{tpu_custom_call.1} parent=1 // pred_check
      _
    $region11: #{tpu_custom_call.1} parent=1 // pred_check_branch
      %31 = sbr.rel (0) target = $region13
    $region12: #{tpu_custom_call.1} parent=1 // pred_region
      %s33 = ssub.s32 2048, 2048
      %34 = vsyncadd [#allocation3], %s33
      %s35 = sshll.u32 [#allocation2], 4
      %s36 = int_to_ptr.vmem [resolvable:$true] %s35
      %41 = dma.hbm_to_vmem [thread:$0]  %s2, 2048, %s36, [#allocation3], 64, 64, 4
    $region13: #{tpu_custom_call.1} parent=1 // pred_fallthru
      _
    // Predicated region
    $region14: #{tpu_custom_call.1} parent=1 // pred_check
      _
    $region15: #{tpu_custom_call.1} parent=1 // pred_check_branch
      %43 = sbr.rel (0) target = $region17
    $region16: #{tpu_custom_call.1} parent=1 // pred_region
      _
    $region17: #{tpu_custom_call.1} parent=1 // pred_fallthru
      _
    // Predicated region
    $region18: #{tpu_custom_call.1} parent=1 // pred_check
      _
    $region19: #{tpu_custom_call.1} parent=1 // pred_check_branch
      %45 = sbr.rel (0) target = $region21
    $region20: #{tpu_custom_call.1} parent=1 // pred_region
      %s47 = ssub.s32 2048, 2048
      %48 = vsyncadd [#allocation6], %s47
      %s49 = sshll.u32 [#allocation5], 4
      %s50 = int_to_ptr.vmem [resolvable:$true] %s49
      %55 = dma.hbm_to_vmem [thread:$0]  %s4, 2048, %s50, [#allocation6], 64, 64, 4
    $region21: #{tpu_custom_call.1} parent=1 // pred_fallthru
      _
    // Predicated region
    $region22: #{tpu_custom_call.1} parent=1 // pred_check
      _
    $region23: #{tpu_custom_call.1} parent=1 // pred_check_branch
      %57 = sbr.rel (0) target = $region25
    $region24: #{tpu_custom_call.1} parent=1 // pred_region
      _
    $region25: #{tpu_custom_call.1} parent=1 // pred_fallthru
      _
    // Predicated region
    $region26: #{tpu_custom_call.1} parent=1 // pred_check
      _
    $region27: #{tpu_custom_call.1} parent=1 // pred_check_branch
      %59 = sbr.rel (0) target = $region29
    $region28: #{tpu_custom_call.1} parent=1 // pred_region
      %s61 = ssub.s32 1024, 1024
      %62 = vsyncadd [#allocation6], %s61
      %s63 = sshll.u32 [#allocation7], 4
      %s64 = int_to_ptr.vmem [resolvable:$true] %s63
      %69 = dma.hbm_to_vmem [thread:$0]  %s6, 1024, %s64, [#allocation6], 64, 64, 4
    $region29: #{tpu_custom_call.1} parent=1 // pred_fallthru
      _
    // Predicated region
    $region30: #{tpu_custom_call.1} parent=1 // pred_check
      _
    $region31: #{tpu_custom_call.1} parent=1 // pred_check_branch
      %71 = sbr.rel (0) target = $region33
    $region32: #{tpu_custom_call.1} parent=1 // pred_region
      _
    $region33: #{tpu_custom_call.1} parent=1 // pred_fallthru
      _
    // Predicated region
    $region34: #{tpu_custom_call.1} parent=1 // pred_check
      _
    $region35: #{tpu_custom_call.1} parent=1 // pred_check_branch
      %73 = sbr.rel (0) target = $region37
    $region36: #{tpu_custom_call.1} parent=1 // pred_region
      %s75 = ssub.s32 2048, 2048
      %76 = vsyncadd [#allocation9], %s75
      %s77 = sshll.u32 [#allocation8], 4
      %s78 = int_to_ptr.vmem [resolvable:$true] %s77
      %83 = dma.hbm_to_vmem [thread:$0]  %s8, 2048, %s78, [#allocation9], 64, 64, 4
    $region37: #{tpu_custom_call.1} parent=1 // pred_fallthru
      _
    // Predicated region
    $region38: #{tpu_custom_call.1} parent=1 // pred_check
      _
    $region39: #{tpu_custom_call.1} parent=1 // pred_check_branch
      %85 = sbr.rel (0) target = $region41
    $region40: #{tpu_custom_call.1} parent=1 // pred_region
      _
    $region41: #{tpu_custom_call.1} parent=1 // pred_fallthru
      _
    // Predicated region
    $region42: #{tpu_custom_call.1} parent=1 // pred_check
      _
    $region43: #{tpu_custom_call.1} parent=1 // pred_check_branch
      %87 = sbr.rel (0) target = $region45
    $region44: #{tpu_custom_call.1} parent=1 // pred_region
      %s89 = ssub.s32 2048, 2048
      %90 = vsyncadd [#allocation9], %s89
      %s91 = sshll.u32 [#allocation10], 4
      %s92 = int_to_ptr.vmem [resolvable:$true] %s91
      %97 = dma.hbm_to_vmem [thread:$0]  %s10, 2048, %s92, [#allocation9], 64, 64, 4
    $region45: #{tpu_custom_call.1} parent=1 // pred_fallthru
      _
    // Predicated region
    $region46: #{tpu_custom_call.1} parent=1 // pred_check
      _
    $region47: #{tpu_custom_call.1} parent=1 // pred_check_branch
      %99 = sbr.rel (0) target = $region49
    $region48: #{tpu_custom_call.1} parent=1 // pred_region
      _
    $region49: #{tpu_custom_call.1} parent=1 // pred_fallthru
      _
    // Predicated region
    $region50: #{tpu_custom_call.1} parent=1 // pred_check
      _
    $region51: #{tpu_custom_call.1} parent=1 // pred_check_branch
      %101 = sbr.rel (0) target = $region53
    $region52: #{tpu_custom_call.1} parent=1 // pred_region
      %s103 = ssub.s32 1024, 1024
      %104 = vsyncadd [#allocation12], %s103
      %s105 = sshll.u32 [#allocation11], 4
      %s106 = int_to_ptr.vmem [resolvable:$true] %s105
      %111 = dma.hbm_to_vmem [thread:$0]  %s12, 1024, %s106, [#allocation12], 64, 64, 4
    $region53: #{tpu_custom_call.1} parent=1 // pred_fallthru
      _
    // Predicated region
    $region54: #{tpu_custom_call.1} parent=1 // pred_check
      _
    $region55: #{tpu_custom_call.1} parent=1 // pred_check_branch
      %113 = sbr.rel (0) target = $region57
    $region56: #{tpu_custom_call.1} parent=1 // pred_region
      _
    $region57: #{tpu_custom_call.1} parent=1 // pred_fallthru
      _
    // Predicated region
    $region58: #{tpu_custom_call.1} parent=1 // pred_check
      _
    $region59: #{tpu_custom_call.1} parent=1 // pred_check_branch
      %115 = sbr.rel (0) target = $region61
    $region60: #{tpu_custom_call.1} parent=1 // pred_region
      %s117 = ssub.s32 1024, 1024
      %118 = vsyncadd [#allocation12], %s117
      %s119 = sshll.u32 [#allocation13], 4
      %s120 = int_to_ptr.vmem [resolvable:$true] %s119
      %125 = dma.hbm_to_vmem [thread:$0]  %s14, 1024, %s120, [#allocation12], 64, 64, 4
    $region61: #{tpu_custom_call.1} parent=1 // pred_fallthru
      _
    // Predicated region
    $region62: #{tpu_custom_call.1} parent=1 // pred_check
      _
    $region63: #{tpu_custom_call.1} parent=1 // pred_check_branch
      %127 = sbr.rel (0) target = $region65
    $region64: #{tpu_custom_call.1} parent=1 // pred_region
      _
    $region65: #{tpu_custom_call.1} parent=1 // pred_fallthru
      _
    // Predicated region
    $region66: #{tpu_custom_call.1} parent=1 // pred_check
      _
    $region67: #{tpu_custom_call.1} parent=1 // pred_check_branch
      %129 = sbr.rel (0) target = $region69
    $region68: #{tpu_custom_call.1} parent=1 // pred_region
      %130 = dma.done [#allocation3], 2048
    $region69: #{tpu_custom_call.1} parent=1 // pred_fallthru
      _
    // Predicated region
    $region70: #{tpu_custom_call.1} parent=1 // pred_check
      _
    $region71: #{tpu_custom_call.1} parent=1 // pred_check_branch
      %132 = sbr.rel (0) target = $region73
    $region72: #{tpu_custom_call.1} parent=1 // pred_region
      %133 = dma.done [#allocation6], 2048
    $region73: #{tpu_custom_call.1} parent=1 // pred_fallthru
      _
    // Predicated region
    $region74: #{tpu_custom_call.1} parent=1 // pred_check
      _
    $region75: #{tpu_custom_call.1} parent=1 // pred_check_branch
      %135 = sbr.rel (0) target = $region77
    $region76: #{tpu_custom_call.1} parent=1 // pred_region
      %136 = dma.done [#allocation6], 1024
    $region77: #{tpu_custom_call.1} parent=1 // pred_fallthru
      _
    // Predicated region
    $region78: #{tpu_custom_call.1} parent=1 // pred_check
      _
    $region79: #{tpu_custom_call.1} parent=1 // pred_check_branch
      %138 = sbr.rel (0) target = $region81
    $region80: #{tpu_custom_call.1} parent=1 // pred_region
      %139 = dma.done [#allocation9], 2048
    $region81: #{tpu_custom_call.1} parent=1 // pred_fallthru
      _
    // Predicated region
    $region82: #{tpu_custom_call.1} parent=1 // pred_check
      _
    $region83: #{tpu_custom_call.1} parent=1 // pred_check_branch
      %141 = sbr.rel (0) target = $region85
    $region84: #{tpu_custom_call.1} parent=1 // pred_region
      %142 = dma.done [#allocation9], 2048
    $region85: #{tpu_custom_call.1} parent=1 // pred_fallthru
      _
    // Predicated region
    $region86: #{tpu_custom_call.1} parent=1 // pred_check
      _
    $region87: #{tpu_custom_call.1} parent=1 // pred_check_branch
      %144 = sbr.rel (0) target = $region89
    $region88: #{tpu_custom_call.1} parent=1 // pred_region
      %145 = dma.done [#allocation12], 1024
    $region89: #{tpu_custom_call.1} parent=1 // pred_fallthru
      _
    // Predicated region
    $region90: #{tpu_custom_call.1} parent=1 // pred_check
      _
    $region91: #{tpu_custom_call.1} parent=1 // pred_check_branch
      %147 = sbr.rel (0) target = $region93
    $region92: #{tpu_custom_call.1} parent=1 // pred_region
      %148 = dma.done [#allocation12], 1024
    $region93: #{tpu_custom_call.1} parent=1 // pred_fallthru
      _
    %v150 = vlaneseq
    %v151 = vshrl.u32 %v150, 7
    %v152 = vadd.s32 %v151, 8
    %vm153 = vcmp.lt.s32.totalorder %v151, 0
    %v154 = vsub.s32 0, %v151
    %v155 = vsel %vm153, %v154, %v151
    %v156 = vshrl.u32 %v155, 3
    %v157 = vand.u32 %v155, 7
    %v158 = vsub.s32 0, %v157
    %v159 = vsel %vm153, %v158, %v157
    %vm160 = vcmp.lt.s32.totalorder %v152, 0
    %v161 = vsub.s32 0, %v152
    %v162 = vsel %vm160, %v161, %v152
    %v163 = vshrl.u32 %v162, 3
    %v164 = vand.u32 %v162, 7
    %v165 = vsub.s32 0, %v164
    %v166 = vsel %vm160, %v165, %v164
    %vm167 = vcmp.ne.s32.totalorder %v159, 0
    %vm168 = vcmp.ne.s32.totalorder %v166, 0
    %vm169 = vcmp.lt.s32.totalorder %v159, 0
    %vm170 = vcmp.lt.s32.totalorder %v166, 0
    %vm171 = vmand %vm169, %vm167
    %vm172 = vmand %vm170, %vm168
    %v173 = vadd.s32 %v159, 8
    %v174 = vadd.s32 %v166, 8
    %v175 = vsel %vm171, %v173, %v159
    %v176 = vsel %vm172, %v174, %v166
    %vm177 = vcmp.ge.s32.totalorder %v175, 1
    %vm178 = vcmp.ge.s32.totalorder %v176, 1
    %vm179 = vcmp.ge.s32.totalorder %v175, 2
    %vm180 = vcmp.ge.s32.totalorder %v176, 2
    %v181 = vld [vmem:[%s0] sm:$0xff]
    %v182 = vld [vmem:[%s0 + $0x8] sm:$0xff]
    %v183 = vld [vmem:[%s1] sm:$0xf]
    %vm184 = vcmask 31744
    %v186 = vsel %vm184, %v181, 0
    %v189 = vsel %vm184, %v182, 0
    %vm191 = vcmask 1043456
    %v193 = vsel %vm191, %v183, 0
    %195 = vmatprep.subr.mxu0 0.0
    %196 = vmatpush1.msra.mxu0 0.0
    %197 = vmatprep.subr.mxu0 0.0
    %198 = vmatpush1.msra.mxu0 0.0
    %199 = vmatprep.subr.mxu0 0.0
    %200 = vmatpush1.msra.mxu0 0.0
    %201 = vmatprep.subr.mxu0 0.0
    %202 = vmatpush1.msra.mxu0 0.0
    %203 = vmatprep.subr.mxu0 0.0
    %204 = vmatpush1.msra.mxu0 0.0
    %205 = vmatprep.subr.mxu0 0.0
    %206 = vmatpush1.msra.mxu0 0.0
    %207 = vmatprep.subr.mxu0 0.0
    %208 = vmatpush1.msra.mxu0 0.0
    %209 = vmatprep.subr.mxu0 0.0
    %210 = vmatpush1.msra.mxu0 0.0
    %211 = vmatprep.subr.mxu0 0.0
    %212 = vmatpush1.msra.mxu0 0.0
    %213 = vmatprep.subr.mxu0 0.0
    %214 = vmatpush1.msra.mxu0 0.0
    %215 = vmatprep.subr.mxu0 0.0
    %216 = vmatpush1.msra.mxu0 0.0
    %217 = vmatprep.subr.mxu0 0.0
    %218 = vmatpush1.msra.mxu0 0.0
    %219 = vmatprep.subr.mxu0 0.0
    %220 = vmatpush1.msra.mxu0 0.0
    %221 = vmatprep.subr.mxu0 0.0
    %222 = vmatpush1.msra.mxu0 0.0
    %223 = vmatprep.subr.mxu0 0.0
    %224 = vmatpush1.msra.mxu0 0.0
    %225 = vmatprep.subr.mxu0 0.0
    %226 = vmatpush1.msra.mxu0 %v193
    %227 = vmatprep.subr.mxu0 0.0
    %228 = vmatpush2.msra.mxu0 0.0
    %229 = vmatprep.subr.mxu0 0.0
    %230 = vmatpush2.msra.mxu0 0.0
    %231 = vmatprep.subr.mxu0 0.0
    %232 = vmatpush2.msra.mxu0 0.0
    %233 = vmatprep.subr.mxu0 0.0
    %234 = vmatpush2.msra.mxu0 0.0
    %235 = vmatprep.subr.mxu0 0.0
    %236 = vmatpush2.msra.mxu0 0.0
    %237 = vmatprep.subr.mxu0 0.0
    %238 = vmatpush2.msra.mxu0 0.0
    %239 = vmatprep.subr.mxu0 0.0
    %240 = vmatpush2.msra.mxu0 0.0
    %241 = vmatprep.subr.mxu0 0.0
    %242 = vmatpush2.msra.mxu0 0.0
    %243 = vmatprep.subr.mxu0 0.0
    %244 = vmatpush2.msra.mxu0 0.0
    %245 = vmatprep.subr.mxu0 0.0
    %246 = vmatpush2.msra.mxu0 0.0
    %247 = vmatprep.subr.mxu0 0.0
    %248 = vmatpush2.msra.mxu0 0.0
    %249 = vmatprep.subr.mxu0 0.0
    %250 = vmatpush2.msra.mxu0 0.0
    %251 = vmatprep.subr.mxu0 0.0
    %252 = vmatpush2.msra.mxu0 0.0
    %253 = vmatprep.subr.mxu0 0.0
    %254 = vmatpush2.msra.mxu0 0.0
    %255 = vmatprep.subr.mxu0 0.0
    %256 = vmatpush2.msra.mxu0 0.0
    %257 = vmatprep.subr.mxu0 0.0
    %258 = vmatpush2.msra.mxu0 0.0
    %259 = vmatprep.mubr.f32.mxu0 0.0
    %260 = vmatmul.mubr.f32.gmra.mxu0 %v186
    %v261 = vpop.f32.mrf.mxu0
    %v262 = vadd.f32 0.0, %v261
    %v263 = vpop.f32.mrf.mxu0
    %264 = vmatprep.mubr.f32.mxu0 0.0
    %265 = vmatmul.mubr.f32.gmra.mxu0 %v189
    %v266 = vpop.f32.mrf.mxu0
    %v267 = vadd.f32 0.0, %v266
    %v268 = vpop.f32.mrf.mxu0
    %269 = vdwg.mxu0
    %v270 = vrot.slane %v262, 7
    %v271 = vrot.slane %v267, 7
    %vm272 = vcmp.lt.s32.totalorder %v151, 1
    %v273 = vsel %vm272, %v270, %v271
    %v274 = vsel %vm272, %v271, %v270
    %v275 = vsel %vm177, 1, 0
    %v276 = vsel %vm178, 1, 0
    %vm277 = vcmp.eq.s32.totalorder %v275, 1
    %vm278 = vcmp.eq.s32.totalorder %v276, 1
    %v279 = vsel %vm277, %v274, 0.0
    %v280 = vsel %vm278, %v273, 0.0
    %v281 = vpack.c.bf16 %v280, %v279
    %v282 = vpack.c.bf16 %v267, %v262
    %v283 = vld [vmem:[#allocation2] sm:$0xf]
    %v284 = vld [vmem:[#allocation2 + $0x4] sm:$0xf]
    %v285 = vld [vmem:[#allocation2 + $0x8] sm:$0xf]
    %v286 = vld [vmem:[#allocation2 + $0xc] sm:$0xf]
    %v287 = vld [vmem:[#allocation2 + $0x10] sm:$0xf]
    %v288 = vld [vmem:[#allocation2 + $0x14] sm:$0xf]
    %v289 = vld [vmem:[#allocation2 + $0x18] sm:$0xf]
    %v290 = vld [vmem:[#allocation2 + $0x1c] sm:$0xf]
    %v291 = vld [vmem:[#allocation2 + $0x20] sm:$0xf]
    %v292 = vld [vmem:[#allocation2 + $0x24] sm:$0xf]
    %v293 = vld [vmem:[#allocation2 + $0x28] sm:$0xf]
    %v294 = vld [vmem:[#allocation2 + $0x2c] sm:$0xf]
    %v295 = vld [vmem:[#allocation2 + $0x30] sm:$0xf]
    %v296 = vld [vmem:[#allocation2 + $0x34] sm:$0xf]
    %v297 = vld [vmem:[#allocation2 + $0x38] sm:$0xf]
    %v298 = vld [vmem:[#allocation2 + $0x3c] sm:$0xf]
    %v299 = vld [vmem:[#allocation2 + $0x40] sm:$0xf]
    %v300 = vld [vmem:[#allocation2 + $0x44] sm:$0xf]
    %v301 = vld [vmem:[#allocation2 + $0x48] sm:$0xf]
    %v302 = vld [vmem:[#allocation2 + $0x4c] sm:$0xf]
    %v303 = vld [vmem:[#allocation2 + $0x50] sm:$0xf]
    %v304 = vld [vmem:[#allocation2 + $0x54] sm:$0xf]
    %v305 = vld [vmem:[#allocation2 + $0x58] sm:$0xf]
    %v306 = vld [vmem:[#allocation2 + $0x5c] sm:$0xf]
    %v307 = vld [vmem:[#allocation2 + $0x60] sm:$0xf]
    %v308 = vld [vmem:[#allocation2 + $0x64] sm:$0xf]
    %v309 = vld [vmem:[#allocation2 + $0x68] sm:$0xf]
    %v310 = vld [vmem:[#allocation2 + $0x6c] sm:$0xf]
    %v311 = vld [vmem:[#allocation2 + $0x70] sm:$0xf]
    %v312 = vld [vmem:[#allocation2 + $0x74] sm:$0xf]
    %v313 = vld [vmem:[#allocation2 + $0x78] sm:$0xf]
    %v314 = vld [vmem:[#allocation2 + $0x7c] sm:$0xf]
    %v315 = vld [vmem:[%s3] sm:$0x1]
    %v317 = vlaneseq
    %v318 = vshrl.u32 %v317, 7
    %v319 = vsub.s32 0, %v318
    %v320 = vrot.slane %v315, %v319
    %v354 = vunpack.c.l.b16 %v283
    %v355 = vunpack.c.l.b16 %v284
    %v356 = vunpack.c.l.b16 %v285
    %v357 = vunpack.c.l.b16 %v286
    %v358 = vunpack.c.l.b16 %v287
    %v359 = vunpack.c.l.b16 %v288
    %v360 = vunpack.c.l.b16 %v289
    %v361 = vunpack.c.l.b16 %v290
    %v362 = vunpack.c.l.b16 %v291
    %v363 = vunpack.c.l.b16 %v292
    %v364 = vunpack.c.l.b16 %v293
    %v365 = vunpack.c.l.b16 %v294
    %v366 = vunpack.c.l.b16 %v295
    %v367 = vunpack.c.l.b16 %v296
    %v368 = vunpack.c.l.b16 %v297
    %v369 = vunpack.c.l.b16 %v298
    %v370 = vunpack.c.l.b16 %v299
    %v371 = vunpack.c.l.b16 %v300
    %v372 = vunpack.c.l.b16 %v301
    %v373 = vunpack.c.l.b16 %v302
    %v374 = vunpack.c.l.b16 %v303
    %v375 = vunpack.c.l.b16 %v304
    %v376 = vunpack.c.l.b16 %v305
    %v377 = vunpack.c.l.b16 %v306
    %v378 = vunpack.c.l.b16 %v307
    %v379 = vunpack.c.l.b16 %v308
    %v380 = vunpack.c.l.b16 %v309
    %v381 = vunpack.c.l.b16 %v310
    %v382 = vunpack.c.l.b16 %v311
    %v383 = vunpack.c.l.b16 %v312
    %v384 = vunpack.c.l.b16 %v313
    %v385 = vunpack.c.l.b16 %v314
    %v386 = vpack.c.b16 %v355, %v354
    %v387 = vpack.c.b16 %v357, %v356
    %v388 = vpack.c.b16 %v359, %v358
    %v389 = vpack.c.b16 %v361, %v360
    %v390 = vpack.c.b16 %v363, %v362
    %v391 = vpack.c.b16 %v365, %v364
    %v392 = vpack.c.b16 %v367, %v366
    %v393 = vpack.c.b16 %v369, %v368
    %v394 = vpack.c.b16 %v371, %v370
    %v395 = vpack.c.b16 %v373, %v372
    %v396 = vpack.c.b16 %v375, %v374
    %v397 = vpack.c.b16 %v377, %v376
    %v398 = vpack.c.b16 %v379, %v378
    %v399 = vpack.c.b16 %v381, %v380
    %v400 = vpack.c.b16 %v383, %v382
    %v401 = vpack.c.b16 %v385, %v384
    %418 = vmatprep.subr.bf16.mxu0 0
    %419 = vmatpush1.bf16.msra.mxu0 %v393
    %420 = vmatprep.subr.bf16.mxu0 0
    %421 = vmatpush1.bf16.msra.mxu0 %v392
    %422 = vmatprep.subr.bf16.mxu0 0
    %423 = vmatpush1.bf16.msra.mxu0 %v391
    %424 = vmatprep.subr.bf16.mxu0 0
    %425 = vmatpush1.bf16.msra.mxu0 %v390
    %426 = vmatprep.subr.bf16.mxu0 0
    %427 = vmatpush1.bf16.msra.mxu0 %v389
    %428 = vmatprep.subr.bf16.mxu0 0
    %429 = vmatpush1.bf16.msra.mxu0 %v388
    %430 = vmatprep.subr.bf16.mxu0 0
    %431 = vmatpush1.bf16.msra.mxu0 %v387
    %432 = vmatprep.subr.bf16.mxu0 0
    %433 = vmatpush1.bf16.msra.mxu0 %v386
    %434 = vmatprep.subr.bf16.mxu0 0
    %435 = vmatpush2.bf16.msra.mxu0 %v401
    %436 = vmatprep.subr.bf16.mxu0 0
    %437 = vmatpush2.bf16.msra.mxu0 %v400
    %438 = vmatprep.subr.bf16.mxu0 0
    %439 = vmatpush2.bf16.msra.mxu0 %v399
    %440 = vmatprep.subr.bf16.mxu0 0
    %441 = vmatpush2.bf16.msra.mxu0 %v398
    %442 = vmatprep.subr.bf16.mxu0 0
    %443 = vmatpush2.bf16.msra.mxu0 %v397
    %444 = vmatprep.subr.bf16.mxu0 0
    %445 = vmatpush2.bf16.msra.mxu0 %v396
    %446 = vmatprep.subr.bf16.mxu0 0
    %447 = vmatpush2.bf16.msra.mxu0 %v395
    %448 = vmatprep.subr.bf16.mxu0 0
    %449 = vmatpush2.bf16.msra.mxu0 %v394
    %450 = vmatprep.mubr.bf16.mxu0 %v282
    %451 = vmatmul.mubr.bf16.gmra.mxu0 %v281
    %v452 = vpop.f32.mrf.mxu0
    %v453 = vadd.f32 %v320, %v452
    %v454 = vpop.f32.mrf.mxu0
    %v455 = vpop.f32.mrf.mxu0
    %v456 = vadd.f32 %v320, %v455
    %v457 = vpop.f32.mrf.mxu0
    %458 = vdwg.mxu0
    %v459 = vmax.f32 %v453, 0.0
    %v460 = vmax.f32 %v456, 0.0
    %v461 = vrot.slane %v459, 7
    %v462 = vrot.slane %v460, 7
    %v463 = vsel %vm272, %v461, %v462
    %v464 = vsel %vm272, %v462, %v461
    %v465 = vsel %vm277, %v464, 0.0
    %v466 = vsel %vm278, %v463, 0.0
    %v467 = vpack.c.bf16 %v466, %v465
    %v468 = vpack.c.bf16 %v460, %v459
    %v469 = vld [vmem:[#allocation5] sm:$0xf]
    %v470 = vld [vmem:[#allocation5 + $0x4] sm:$0xf]
    %v471 = vld [vmem:[#allocation5 + $0x8] sm:$0xf]
    %v472 = vld [vmem:[#allocation5 + $0xc] sm:$0xf]
    %v473 = vld [vmem:[#allocation5 + $0x10] sm:$0xf]
    %v474 = vld [vmem:[#allocation5 + $0x14] sm:$0xf]
    %v475 = vld [vmem:[#allocation5 + $0x18] sm:$0xf]
    %v476 = vld [vmem:[#allocation5 + $0x1c] sm:$0xf]
    %v477 = vld [vmem:[#allocation5 + $0x20] sm:$0xf]
    %v478 = vld [vmem:[#allocation5 + $0x24] sm:$0xf]
    %v479 = vld [vmem:[#allocation5 + $0x28] sm:$0xf]
    %v480 = vld [vmem:[#allocation5 + $0x2c] sm:$0xf]
    %v481 = vld [vmem:[#allocation5 + $0x30] sm:$0xf]
    %v482 = vld [vmem:[#allocation5 + $0x34] sm:$0xf]
    %v483 = vld [vmem:[#allocation5 + $0x38] sm:$0xf]
    %v484 = vld [vmem:[#allocation5 + $0x3c] sm:$0xf]
    %v485 = vld [vmem:[#allocation5 + $0x40] sm:$0xf]
    %v486 = vld [vmem:[#allocation5 + $0x44] sm:$0xf]
    %v487 = vld [vmem:[#allocation5 + $0x48] sm:$0xf]
    %v488 = vld [vmem:[#allocation5 + $0x4c] sm:$0xf]
    %v489 = vld [vmem:[#allocation5 + $0x50] sm:$0xf]
    %v490 = vld [vmem:[#allocation5 + $0x54] sm:$0xf]
    %v491 = vld [vmem:[#allocation5 + $0x58] sm:$0xf]
    %v492 = vld [vmem:[#allocation5 + $0x5c] sm:$0xf]
    %v493 = vld [vmem:[#allocation5 + $0x60] sm:$0xf]
    %v494 = vld [vmem:[#allocation5 + $0x64] sm:$0xf]
    %v495 = vld [vmem:[#allocation5 + $0x68] sm:$0xf]
    %v496 = vld [vmem:[#allocation5 + $0x6c] sm:$0xf]
    %v497 = vld [vmem:[#allocation5 + $0x70] sm:$0xf]
    %v498 = vld [vmem:[#allocation5 + $0x74] sm:$0xf]
    %v499 = vld [vmem:[#allocation5 + $0x78] sm:$0xf]
    %v500 = vld [vmem:[#allocation5 + $0x7c] sm:$0xf]
    %v501 = vld [vmem:[%s5] sm:$0x1]
    %v503 = vlaneseq
    %v504 = vshrl.u32 %v503, 7
    %v505 = vsub.s32 0, %v504
    %v506 = vrot.slane %v501, %v505
    %v540 = vunpack.c.l.b16 %v469
    %v541 = vunpack.c.l.b16 %v470
    %v542 = vunpack.c.l.b16 %v471
    %v543 = vunpack.c.l.b16 %v472
    %v544 = vunpack.c.l.b16 %v473
    %v545 = vunpack.c.l.b16 %v474
    %v546 = vunpack.c.l.b16 %v475
    %v547 = vunpack.c.l.b16 %v476
    %v548 = vunpack.c.l.b16 %v477
    %v549 = vunpack.c.l.b16 %v478
    %v550 = vunpack.c.l.b16 %v479
    %v551 = vunpack.c.l.b16 %v480
    %v552 = vunpack.c.l.b16 %v481
    %v553 = vunpack.c.l.b16 %v482
    %v554 = vunpack.c.l.b16 %v483
    %v555 = vunpack.c.l.b16 %v484
    %v556 = vunpack.c.l.b16 %v485
    %v557 = vunpack.c.l.b16 %v486
    %v558 = vunpack.c.l.b16 %v487
    %v559 = vunpack.c.l.b16 %v488
    %v560 = vunpack.c.l.b16 %v489
    %v561 = vunpack.c.l.b16 %v490
    %v562 = vunpack.c.l.b16 %v491
    %v563 = vunpack.c.l.b16 %v492
    %v564 = vunpack.c.l.b16 %v493
    %v565 = vunpack.c.l.b16 %v494
    %v566 = vunpack.c.l.b16 %v495
    %v567 = vunpack.c.l.b16 %v496
    %v568 = vunpack.c.l.b16 %v497
    %v569 = vunpack.c.l.b16 %v498
    %v570 = vunpack.c.l.b16 %v499
    %v571 = vunpack.c.l.b16 %v500
    %v572 = vpack.c.b16 %v541, %v540
    %v573 = vpack.c.b16 %v543, %v542
    %v574 = vpack.c.b16 %v545, %v544
    %v575 = vpack.c.b16 %v547, %v546
    %v576 = vpack.c.b16 %v549, %v548
    %v577 = vpack.c.b16 %v551, %v550
    %v578 = vpack.c.b16 %v553, %v552
    %v579 = vpack.c.b16 %v555, %v554
    %v580 = vpack.c.b16 %v557, %v556
    %v581 = vpack.c.b16 %v559, %v558
    %v582 = vpack.c.b16 %v561, %v560
    %v583 = vpack.c.b16 %v563, %v562
    %v584 = vpack.c.b16 %v565, %v564
    %v585 = vpack.c.b16 %v567, %v566
    %v586 = vpack.c.b16 %v569, %v568
    %v587 = vpack.c.b16 %v571, %v570
    %604 = vmatprep.subr.bf16.mxu0 0
    %605 = vmatpush1.bf16.msra.mxu0 %v579
    %606 = vmatprep.subr.bf16.mxu0 0
    %607 = vmatpush1.bf16.msra.mxu0 %v578
    %608 = vmatprep.subr.bf16.mxu0 0
    %609 = vmatpush1.bf16.msra.mxu0 %v577
    %610 = vmatprep.subr.bf16.mxu0 0
    %611 = vmatpush1.bf16.msra.mxu0 %v576
    %612 = vmatprep.subr.bf16.mxu0 0
    %613 = vmatpush1.bf16.msra.mxu0 %v575
    %614 = vmatprep.subr.bf16.mxu0 0
    %615 = vmatpush1.bf16.msra.mxu0 %v574
    %616 = vmatprep.subr.bf16.mxu0 0
    %617 = vmatpush1.bf16.msra.mxu0 %v573
    %618 = vmatprep.subr.bf16.mxu0 0
    %619 = vmatpush1.bf16.msra.mxu0 %v572
    %620 = vmatprep.subr.bf16.mxu0 0
    %621 = vmatpush2.bf16.msra.mxu0 %v587
    %622 = vmatprep.subr.bf16.mxu0 0
    %623 = vmatpush2.bf16.msra.mxu0 %v586
    %624 = vmatprep.subr.bf16.mxu0 0
    %625 = vmatpush2.bf16.msra.mxu0 %v585
    %626 = vmatprep.subr.bf16.mxu0 0
    %627 = vmatpush2.bf16.msra.mxu0 %v584
    %628 = vmatprep.subr.bf16.mxu0 0
    %629 = vmatpush2.bf16.msra.mxu0 %v583
    %630 = vmatprep.subr.bf16.mxu0 0
    %631 = vmatpush2.bf16.msra.mxu0 %v582
    %632 = vmatprep.subr.bf16.mxu0 0
    %633 = vmatpush2.bf16.msra.mxu0 %v581
    %634 = vmatprep.subr.bf16.mxu0 0
    %635 = vmatpush2.bf16.msra.mxu0 %v580
    %636 = vmatprep.mubr.bf16.mxu0 %v468
    %637 = vmatmul.mubr.bf16.gmra.mxu0 %v467
    %v638 = vpop.f32.mrf.mxu0
    %v639 = vadd.f32 %v506, %v638
    %v640 = vpop.f32.mrf.mxu0
    %v641 = vpop.f32.mrf.mxu0
    %v642 = vadd.f32 %v506, %v641
    %v643 = vpop.f32.mrf.mxu0
    %644 = vdwg.mxu0
    %v645 = vmax.f32 %v639, 0.0
    %v646 = vmax.f32 %v642, 0.0
    %v647 = vld [vmem:[#allocation7] sm:$0xf]
    %v648 = vld [vmem:[#allocation7 + $0x4] sm:$0xf]
    %v649 = vld [vmem:[#allocation7 + $0x8] sm:$0xf]
    %v650 = vld [vmem:[#allocation7 + $0xc] sm:$0xf]
    %v651 = vld [vmem:[#allocation7 + $0x10] sm:$0xf]
    %v652 = vld [vmem:[#allocation7 + $0x14] sm:$0xf]
    %v653 = vld [vmem:[#allocation7 + $0x18] sm:$0xf]
    %v654 = vld [vmem:[#allocation7 + $0x1c] sm:$0xf]
    %v655 = vld [vmem:[#allocation7 + $0x20] sm:$0xf]
    %v656 = vld [vmem:[#allocation7 + $0x24] sm:$0xf]
    %v657 = vld [vmem:[#allocation7 + $0x28] sm:$0xf]
    %v658 = vld [vmem:[#allocation7 + $0x2c] sm:$0xf]
    %v659 = vld [vmem:[#allocation7 + $0x30] sm:$0xf]
    %v660 = vld [vmem:[#allocation7 + $0x34] sm:$0xf]
    %v661 = vld [vmem:[#allocation7 + $0x38] sm:$0xf]
    %v662 = vld [vmem:[#allocation7 + $0x3c] sm:$0xf]
    %v663 = vld [vmem:[%s7] sm:$0x1]
    %v665 = vlaneseq
    %v666 = vshrl.u32 %v665, 7
    %v667 = vsub.s32 0, %v666
    %v668 = vrot.slane %v663, %v667
    %v686 = vunpack.c.l.b16 %v647
    %v687 = vunpack.c.l.b16 %v648
    %v688 = vunpack.c.l.b16 %v649
    %v689 = vunpack.c.l.b16 %v650
    %v690 = vunpack.c.l.b16 %v651
    %v691 = vunpack.c.l.b16 %v652
    %v692 = vunpack.c.l.b16 %v653
    %v693 = vunpack.c.l.b16 %v654
    %v694 = vunpack.c.l.b16 %v655
    %v695 = vunpack.c.l.b16 %v656
    %v696 = vunpack.c.l.b16 %v657
    %v697 = vunpack.c.l.b16 %v658
    %v698 = vunpack.c.l.b16 %v659
    %v699 = vunpack.c.l.b16 %v660
    %v700 = vunpack.c.l.b16 %v661
    %v701 = vunpack.c.l.b16 %v662
    %v702 = vpack.c.b16 %v687, %v686
    %v703 = vpack.c.b16 %v689, %v688
    %v704 = vpack.c.b16 %v691, %v690
    %v705 = vpack.c.b16 %v693, %v692
    %v706 = vpack.c.b16 %v695, %v694
    %v707 = vpack.c.b16 %v697, %v696
    %v708 = vpack.c.b16 %v699, %v698
    %v709 = vpack.c.b16 %v701, %v700
    %718 = vmatprep.subr.bf16.mxu0 0
    %719 = vmatpush1.bf16.msra.mxu0 %v709
    %720 = vmatprep.subr.bf16.mxu0 0
    %721 = vmatpush1.bf16.msra.mxu0 %v708
    %722 = vmatprep.subr.bf16.mxu0 0
    %723 = vmatpush1.bf16.msra.mxu0 %v707
    %724 = vmatprep.subr.bf16.mxu0 0
    %725 = vmatpush1.bf16.msra.mxu0 %v706
    %726 = vmatprep.subr.bf16.mxu0 0
    %727 = vmatpush1.bf16.msra.mxu0 %v705
    %728 = vmatprep.subr.bf16.mxu0 0
    %729 = vmatpush1.bf16.msra.mxu0 %v704
    %730 = vmatprep.subr.bf16.mxu0 0
    %731 = vmatpush1.bf16.msra.mxu0 %v703
    %732 = vmatprep.subr.bf16.mxu0 0
    %733 = vmatpush1.bf16.msra.mxu0 %v702
    %734 = vmatprep.subr.bf16.mxu0 0
    %735 = vmatpush2.bf16.msra.mxu0 0
    %736 = vmatprep.subr.bf16.mxu0 0
    %737 = vmatpush2.bf16.msra.mxu0 0
    %738 = vmatprep.subr.bf16.mxu0 0
    %739 = vmatpush2.bf16.msra.mxu0 0
    %740 = vmatprep.subr.bf16.mxu0 0
    %741 = vmatpush2.bf16.msra.mxu0 0
    %742 = vmatprep.subr.bf16.mxu0 0
    %743 = vmatpush2.bf16.msra.mxu0 0
    %744 = vmatprep.subr.bf16.mxu0 0
    %745 = vmatpush2.bf16.msra.mxu0 0
    %746 = vmatprep.subr.bf16.mxu0 0
    %747 = vmatpush2.bf16.msra.mxu0 0
    %748 = vmatprep.subr.bf16.mxu0 0
    %749 = vmatpush2.bf16.msra.mxu0 0
    %750 = vmatprep.mubr.bf16.mxu0 0
    %751 = vmatmul.mubr.bf16.gmra.mxu0 %v282
    %v752 = vpop.f32.mrf.mxu0
    %v753 = vadd.f32 %v668, %v752
    %v754 = vpop.f32.mrf.mxu0
    %v755 = vpop.f32.mrf.mxu0
    %v756 = vadd.f32 %v668, %v755
    %v757 = vpop.f32.mrf.mxu0
    %758 = vdwg.mxu0
    %v759 = vadd.f32 %v645, %v753
    %v760 = vadd.f32 %v646, %v756
    %v761 = vmax.f32 %v759, 0.0
    %v762 = vmax.f32 %v760, 0.0
    %v763 = vrot.slane %v761, 6
    %v764 = vrot.slane %v762, 6
    %vm765 = vcmp.lt.s32.totalorder %v151, 2
    %v766 = vsel %vm765, %v763, %v764
    %v767 = vsel %vm765, %v764, %v763
    %v768 = vsel %vm179, 1, 0
    %v769 = vsel %vm180, 1, 0
    %vm770 = vcmp.eq.s32.totalorder %v768, 1
    %vm771 = vcmp.eq.s32.totalorder %v769, 1
    %v772 = vsel %vm770, %v767, 0.0
    %v773 = vsel %vm771, %v766, 0.0
    %v774 = vpack.c.bf16 %v773, %v772
    %v775 = vpack.c.bf16 %v762, %v761
    %v776 = vld [vmem:[#allocation8] sm:$0xf]
    %v777 = vld [vmem:[#allocation8 + $0x4] sm:$0xf]
    %v778 = vld [vmem:[#allocation8 + $0x8] sm:$0xf]
    %v779 = vld [vmem:[#allocation8 + $0xc] sm:$0xf]
    %v780 = vld [vmem:[#allocation8 + $0x10] sm:$0xf]
    %v781 = vld [vmem:[#allocation8 + $0x14] sm:$0xf]
    %v782 = vld [vmem:[#allocation8 + $0x18] sm:$0xf]
    %v783 = vld [vmem:[#allocation8 + $0x1c] sm:$0xf]
    %v784 = vld [vmem:[#allocation8 + $0x20] sm:$0xf]
    %v785 = vld [vmem:[#allocation8 + $0x24] sm:$0xf]
    %v786 = vld [vmem:[#allocation8 + $0x28] sm:$0xf]
    %v787 = vld [vmem:[#allocation8 + $0x2c] sm:$0xf]
    %v788 = vld [vmem:[#allocation8 + $0x30] sm:$0xf]
    %v789 = vld [vmem:[#allocation8 + $0x34] sm:$0xf]
    %v790 = vld [vmem:[#allocation8 + $0x38] sm:$0xf]
    %v791 = vld [vmem:[#allocation8 + $0x3c] sm:$0xf]
    %v792 = vld [vmem:[#allocation8 + $0x40] sm:$0xf]
    %v793 = vld [vmem:[#allocation8 + $0x44] sm:$0xf]
    %v794 = vld [vmem:[#allocation8 + $0x48] sm:$0xf]
    %v795 = vld [vmem:[#allocation8 + $0x4c] sm:$0xf]
    %v796 = vld [vmem:[#allocation8 + $0x50] sm:$0xf]
    %v797 = vld [vmem:[#allocation8 + $0x54] sm:$0xf]
    %v798 = vld [vmem:[#allocation8 + $0x58] sm:$0xf]
    %v799 = vld [vmem:[#allocation8 + $0x5c] sm:$0xf]
    %v800 = vld [vmem:[#allocation8 + $0x60] sm:$0xf]
    %v801 = vld [vmem:[#allocation8 + $0x64] sm:$0xf]
    %v802 = vld [vmem:[#allocation8 + $0x68] sm:$0xf]
    %v803 = vld [vmem:[#allocation8 + $0x6c] sm:$0xf]
    %v804 = vld [vmem:[#allocation8 + $0x70] sm:$0xf]
    %v805 = vld [vmem:[#allocation8 + $0x74] sm:$0xf]
    %v806 = vld [vmem:[#allocation8 + $0x78] sm:$0xf]
    %v807 = vld [vmem:[#allocation8 + $0x7c] sm:$0xf]
    %v808 = vld [vmem:[%s9] sm:$0x1]
    %v810 = vlaneseq
    %v811 = vshrl.u32 %v810, 7
    %v812 = vsub.s32 0, %v811
    %v813 = vrot.slane %v808, %v812
    %v847 = vunpack.c.l.b16 %v776
    %v848 = vunpack.c.l.b16 %v777
    %v849 = vunpack.c.l.b16 %v778
    %v850 = vunpack.c.l.b16 %v779
    %v851 = vunpack.c.l.b16 %v780
    %v852 = vunpack.c.l.b16 %v781
    %v853 = vunpack.c.l.b16 %v782
    %v854 = vunpack.c.l.b16 %v783
    %v855 = vunpack.c.l.b16 %v784
    %v856 = vunpack.c.l.b16 %v785
    %v857 = vunpack.c.l.b16 %v786
    %v858 = vunpack.c.l.b16 %v787
    %v859 = vunpack.c.l.b16 %v788
    %v860 = vunpack.c.l.b16 %v789
    %v861 = vunpack.c.l.b16 %v790
    %v862 = vunpack.c.l.b16 %v791
    %v863 = vunpack.c.l.b16 %v792
    %v864 = vunpack.c.l.b16 %v793
    %v865 = vunpack.c.l.b16 %v794
    %v866 = vunpack.c.l.b16 %v795
    %v867 = vunpack.c.l.b16 %v796
    %v868 = vunpack.c.l.b16 %v797
    %v869 = vunpack.c.l.b16 %v798
    %v870 = vunpack.c.l.b16 %v799
    %v871 = vunpack.c.l.b16 %v800
    %v872 = vunpack.c.l.b16 %v801
    %v873 = vunpack.c.l.b16 %v802
    %v874 = vunpack.c.l.b16 %v803
    %v875 = vunpack.c.l.b16 %v804
    %v876 = vunpack.c.l.b16 %v805
    %v877 = vunpack.c.l.b16 %v806
    %v878 = vunpack.c.l.b16 %v807
    %v879 = vpack.c.b16 %v848, %v847
    %v880 = vpack.c.b16 %v850, %v849
    %v881 = vpack.c.b16 %v852, %v851
    %v882 = vpack.c.b16 %v854, %v853
    %v883 = vpack.c.b16 %v856, %v855
    %v884 = vpack.c.b16 %v858, %v857
    %v885 = vpack.c.b16 %v860, %v859
    %v886 = vpack.c.b16 %v862, %v861
    %v887 = vpack.c.b16 %v864, %v863
    %v888 = vpack.c.b16 %v866, %v865
    %v889 = vpack.c.b16 %v868, %v867
    %v890 = vpack.c.b16 %v870, %v869
    %v891 = vpack.c.b16 %v872, %v871
    %v892 = vpack.c.b16 %v874, %v873
    %v893 = vpack.c.b16 %v876, %v875
    %v894 = vpack.c.b16 %v878, %v877
    %911 = vmatprep.subr.bf16.mxu0 0
    %912 = vmatpush1.bf16.msra.mxu0 %v886
    %913 = vmatprep.subr.bf16.mxu0 0
    %914 = vmatpush1.bf16.msra.mxu0 %v885
    %915 = vmatprep.subr.bf16.mxu0 0
    %916 = vmatpush1.bf16.msra.mxu0 %v884
    %917 = vmatprep.subr.bf16.mxu0 0
    %918 = vmatpush1.bf16.msra.mxu0 %v883
    %919 = vmatprep.subr.bf16.mxu0 0
    %920 = vmatpush1.bf16.msra.mxu0 %v882
    %921 = vmatprep.subr.bf16.mxu0 0
    %922 = vmatpush1.bf16.msra.mxu0 %v881
    %923 = vmatprep.subr.bf16.mxu0 0
    %924 = vmatpush1.bf16.msra.mxu0 %v880
    %925 = vmatprep.subr.bf16.mxu0 0
    %926 = vmatpush1.bf16.msra.mxu0 %v879
    %927 = vmatprep.subr.bf16.mxu0 0
    %928 = vmatpush2.bf16.msra.mxu0 %v894
    %929 = vmatprep.subr.bf16.mxu0 0
    %930 = vmatpush2.bf16.msra.mxu0 %v893
    %931 = vmatprep.subr.bf16.mxu0 0
    %932 = vmatpush2.bf16.msra.mxu0 %v892
    %933 = vmatprep.subr.bf16.mxu0 0
    %934 = vmatpush2.bf16.msra.mxu0 %v891
    %935 = vmatprep.subr.bf16.mxu0 0
    %936 = vmatpush2.bf16.msra.mxu0 %v890
    %937 = vmatprep.subr.bf16.mxu0 0
    %938 = vmatpush2.bf16.msra.mxu0 %v889
    %939 = vmatprep.subr.bf16.mxu0 0
    %940 = vmatpush2.bf16.msra.mxu0 %v888
    %941 = vmatprep.subr.bf16.mxu0 0
    %942 = vmatpush2.bf16.msra.mxu0 %v887
    %943 = vmatprep.mubr.bf16.mxu0 %v775
    %944 = vmatmul.mubr.bf16.gmra.mxu0 %v774
    %v945 = vpop.f32.mrf.mxu0
    %v946 = vadd.f32 %v813, %v945
    %v947 = vpop.f32.mrf.mxu0
    %v948 = vpop.f32.mrf.mxu0
    %v949 = vadd.f32 %v813, %v948
    %v950 = vpop.f32.mrf.mxu0
    %951 = vdwg.mxu0
    %v952 = vmax.f32 %v946, 0.0
    %v953 = vmax.f32 %v949, 0.0
    %v954 = vrot.slane %v952, 6
    %v955 = vrot.slane %v953, 6
    %v956 = vsel %vm765, %v954, %v955
    %v957 = vsel %vm765, %v955, %v954
    %v958 = vsel %vm770, %v957, 0.0
    %v959 = vsel %vm771, %v956, 0.0
    %v960 = vpack.c.bf16 %v959, %v958
    %v961 = vpack.c.bf16 %v953, %v952
    %v962 = vld [vmem:[#allocation10] sm:$0xf]
    %v963 = vld [vmem:[#allocation10 + $0x4] sm:$0xf]
    %v964 = vld [vmem:[#allocation10 + $0x8] sm:$0xf]
    %v965 = vld [vmem:[#allocation10 + $0xc] sm:$0xf]
    %v966 = vld [vmem:[#allocation10 + $0x10] sm:$0xf]
    %v967 = vld [vmem:[#allocation10 + $0x14] sm:$0xf]
    %v968 = vld [vmem:[#allocation10 + $0x18] sm:$0xf]
    %v969 = vld [vmem:[#allocation10 + $0x1c] sm:$0xf]
    %v970 = vld [vmem:[#allocation10 + $0x20] sm:$0xf]
    %v971 = vld [vmem:[#allocation10 + $0x24] sm:$0xf]
    %v972 = vld [vmem:[#allocation10 + $0x28] sm:$0xf]
    %v973 = vld [vmem:[#allocation10 + $0x2c] sm:$0xf]
    %v974 = vld [vmem:[#allocation10 + $0x30] sm:$0xf]
    %v975 = vld [vmem:[#allocation10 + $0x34] sm:$0xf]
    %v976 = vld [vmem:[#allocation10 + $0x38] sm:$0xf]
    %v977 = vld [vmem:[#allocation10 + $0x3c] sm:$0xf]
    %v978 = vld [vmem:[#allocation10 + $0x40] sm:$0xf]
    %v979 = vld [vmem:[#allocation10 + $0x44] sm:$0xf]
    %v980 = vld [vmem:[#allocation10 + $0x48] sm:$0xf]
    %v981 = vld [vmem:[#allocation10 + $0x4c] sm:$0xf]
    %v982 = vld [vmem:[#allocation10 + $0x50] sm:$0xf]
    %v983 = vld [vmem:[#allocation10 + $0x54] sm:$0xf]
    %v984 = vld [vmem:[#allocation10 + $0x58] sm:$0xf]
    %v985 = vld [vmem:[#allocation10 + $0x5c] sm:$0xf]
    %v986 = vld [vmem:[#allocation10 + $0x60] sm:$0xf]
    %v987 = vld [vmem:[#allocation10 + $0x64] sm:$0xf]
    %v988 = vld [vmem:[#allocation10 + $0x68] sm:$0xf]
    %v989 = vld [vmem:[#allocation10 + $0x6c] sm:$0xf]
    %v990 = vld [vmem:[#allocation10 + $0x70] sm:$0xf]
    %v991 = vld [vmem:[#allocation10 + $0x74] sm:$0xf]
    %v992 = vld [vmem:[#allocation10 + $0x78] sm:$0xf]
    %v993 = vld [vmem:[#allocation10 + $0x7c] sm:$0xf]
    %v994 = vld [vmem:[%s11] sm:$0x1]
    %v996 = vlaneseq
    %v997 = vshrl.u32 %v996, 7
    %v998 = vsub.s32 0, %v997
    %v999 = vrot.slane %v994, %v998
    %v1033 = vunpack.c.l.b16 %v962
    %v1034 = vunpack.c.l.b16 %v963
    %v1035 = vunpack.c.l.b16 %v964
    %v1036 = vunpack.c.l.b16 %v965
    %v1037 = vunpack.c.l.b16 %v966
    %v1038 = vunpack.c.l.b16 %v967
    %v1039 = vunpack.c.l.b16 %v968
    %v1040 = vunpack.c.l.b16 %v969
    %v1041 = vunpack.c.l.b16 %v970
    %v1042 = vunpack.c.l.b16 %v971
    %v1043 = vunpack.c.l.b16 %v972
    %v1044 = vunpack.c.l.b16 %v973
    %v1045 = vunpack.c.l.b16 %v974
    %v1046 = vunpack.c.l.b16 %v975
    %v1047 = vunpack.c.l.b16 %v976
    %v1048 = vunpack.c.l.b16 %v977
    %v1049 = vunpack.c.l.b16 %v978
    %v1050 = vunpack.c.l.b16 %v979
    %v1051 = vunpack.c.l.b16 %v980
    %v1052 = vunpack.c.l.b16 %v981
    %v1053 = vunpack.c.l.b16 %v982
    %v1054 = vunpack.c.l.b16 %v983
    %v1055 = vunpack.c.l.b16 %v984
    %v1056 = vunpack.c.l.b16 %v985
    %v1057 = vunpack.c.l.b16 %v986
    %v1058 = vunpack.c.l.b16 %v987
    %v1059 = vunpack.c.l.b16 %v988
    %v1060 = vunpack.c.l.b16 %v989
    %v1061 = vunpack.c.l.b16 %v990
    %v1062 = vunpack.c.l.b16 %v991
    %v1063 = vunpack.c.l.b16 %v992
    %v1064 = vunpack.c.l.b16 %v993
    %v1065 = vpack.c.b16 %v1034, %v1033
    %v1066 = vpack.c.b16 %v1036, %v1035
    %v1067 = vpack.c.b16 %v1038, %v1037
    %v1068 = vpack.c.b16 %v1040, %v1039
    %v1069 = vpack.c.b16 %v1042, %v1041
    %v1070 = vpack.c.b16 %v1044, %v1043
    %v1071 = vpack.c.b16 %v1046, %v1045
    %v1072 = vpack.c.b16 %v1048, %v1047
    %v1073 = vpack.c.b16 %v1050, %v1049
    %v1074 = vpack.c.b16 %v1052, %v1051
    %v1075 = vpack.c.b16 %v1054, %v1053
    %v1076 = vpack.c.b16 %v1056, %v1055
    %v1077 = vpack.c.b16 %v1058, %v1057
    %v1078 = vpack.c.b16 %v1060, %v1059
    %v1079 = vpack.c.b16 %v1062, %v1061
    %v1080 = vpack.c.b16 %v1064, %v1063
    %1097 = vmatprep.subr.bf16.mxu0 0
    %1098 = vmatpush1.bf16.msra.mxu0 %v1072
    %1099 = vmatprep.subr.bf16.mxu0 0
    %1100 = vmatpush1.bf16.msra.mxu0 %v1071
    %1101 = vmatprep.subr.bf16.mxu0 0
    %1102 = vmatpush1.bf16.msra.mxu0 %v1070
    %1103 = vmatprep.subr.bf16.mxu0 0
    %1104 = vmatpush1.bf16.msra.mxu0 %v1069
    %1105 = vmatprep.subr.bf16.mxu0 0
    %1106 = vmatpush1.bf16.msra.mxu0 %v1068
    %1107 = vmatprep.subr.bf16.mxu0 0
    %1108 = vmatpush1.bf16.msra.mxu0 %v1067
    %1109 = vmatprep.subr.bf16.mxu0 0
    %1110 = vmatpush1.bf16.msra.mxu0 %v1066
    %1111 = vmatprep.subr.bf16.mxu0 0
    %1112 = vmatpush1.bf16.msra.mxu0 %v1065
    %1113 = vmatprep.subr.bf16.mxu0 0
    %1114 = vmatpush2.bf16.msra.mxu0 %v1080
    %1115 = vmatprep.subr.bf16.mxu0 0
    %1116 = vmatpush2.bf16.msra.mxu0 %v1079
    %1117 = vmatprep.subr.bf16.mxu0 0
    %1118 = vmatpush2.bf16.msra.mxu0 %v1078
    %1119 = vmatprep.subr.bf16.mxu0 0
    %1120 = vmatpush2.bf16.msra.mxu0 %v1077
    %1121 = vmatprep.subr.bf16.mxu0 0
    %1122 = vmatpush2.bf16.msra.mxu0 %v1076
    %1123 = vmatprep.subr.bf16.mxu0 0
    %1124 = vmatpush2.bf16.msra.mxu0 %v1075
    %1125 = vmatprep.subr.bf16.mxu0 0
    %1126 = vmatpush2.bf16.msra.mxu0 %v1074
    %1127 = vmatprep.subr.bf16.mxu0 0
    %1128 = vmatpush2.bf16.msra.mxu0 %v1073
    %1129 = vmatprep.mubr.bf16.mxu0 %v961
    %1130 = vmatmul.mubr.bf16.gmra.mxu0 %v960
    %v1131 = vpop.f32.mrf.mxu0
    %v1132 = vadd.f32 %v999, %v1131
    %v1133 = vpop.f32.mrf.mxu0
    %v1134 = vpop.f32.mrf.mxu0
    %v1135 = vadd.f32 %v999, %v1134
    %v1136 = vpop.f32.mrf.mxu0
    %1137 = vdwg.mxu0
    %v1138 = vmax.f32 %v1132, 0.0
    %v1139 = vmax.f32 %v1135, 0.0
    %v1140 = vld [vmem:[#allocation11] sm:$0xf]
    %v1141 = vld [vmem:[#allocation11 + $0x4] sm:$0xf]
    %v1142 = vld [vmem:[#allocation11 + $0x8] sm:$0xf]
    %v1143 = vld [vmem:[#allocation11 + $0xc] sm:$0xf]
    %v1144 = vld [vmem:[#allocation11 + $0x10] sm:$0xf]
    %v1145 = vld [vmem:[#allocation11 + $0x14] sm:$0xf]
    %v1146 = vld [vmem:[#allocation11 + $0x18] sm:$0xf]
    %v1147 = vld [vmem:[#allocation11 + $0x1c] sm:$0xf]
    %v1148 = vld [vmem:[#allocation11 + $0x20] sm:$0xf]
    %v1149 = vld [vmem:[#allocation11 + $0x24] sm:$0xf]
    %v1150 = vld [vmem:[#allocation11 + $0x28] sm:$0xf]
    %v1151 = vld [vmem:[#allocation11 + $0x2c] sm:$0xf]
    %v1152 = vld [vmem:[#allocation11 + $0x30] sm:$0xf]
    %v1153 = vld [vmem:[#allocation11 + $0x34] sm:$0xf]
    %v1154 = vld [vmem:[#allocation11 + $0x38] sm:$0xf]
    %v1155 = vld [vmem:[#allocation11 + $0x3c] sm:$0xf]
    %v1156 = vld [vmem:[%s13] sm:$0x1]
    %v1158 = vlaneseq
    %v1159 = vshrl.u32 %v1158, 7
    %v1160 = vsub.s32 0, %v1159
    %v1161 = vrot.slane %v1156, %v1160
    %v1179 = vunpack.c.l.b16 %v1140
    %v1180 = vunpack.c.l.b16 %v1141
    %v1181 = vunpack.c.l.b16 %v1142
    %v1182 = vunpack.c.l.b16 %v1143
    %v1183 = vunpack.c.l.b16 %v1144
    %v1184 = vunpack.c.l.b16 %v1145
    %v1185 = vunpack.c.l.b16 %v1146
    %v1186 = vunpack.c.l.b16 %v1147
    %v1187 = vunpack.c.l.b16 %v1148
    %v1188 = vunpack.c.l.b16 %v1149
    %v1189 = vunpack.c.l.b16 %v1150
    %v1190 = vunpack.c.l.b16 %v1151
    %v1191 = vunpack.c.l.b16 %v1152
    %v1192 = vunpack.c.l.b16 %v1153
    %v1193 = vunpack.c.l.b16 %v1154
    %v1194 = vunpack.c.l.b16 %v1155
    %v1195 = vpack.c.b16 %v1180, %v1179
    %v1196 = vpack.c.b16 %v1182, %v1181
    %v1197 = vpack.c.b16 %v1184, %v1183
    %v1198 = vpack.c.b16 %v1186, %v1185
    %v1199 = vpack.c.b16 %v1188, %v1187
    %v1200 = vpack.c.b16 %v1190, %v1189
    %v1201 = vpack.c.b16 %v1192, %v1191
    %v1202 = vpack.c.b16 %v1194, %v1193
    %1211 = vmatprep.subr.bf16.mxu0 0
    %1212 = vmatpush1.bf16.msra.mxu0 %v1202
    %1213 = vmatprep.subr.bf16.mxu0 0
    %1214 = vmatpush1.bf16.msra.mxu0 %v1201
    %1215 = vmatprep.subr.bf16.mxu0 0
    %1216 = vmatpush1.bf16.msra.mxu0 %v1200
    %1217 = vmatprep.subr.bf16.mxu0 0
    %1218 = vmatpush1.bf16.msra.mxu0 %v1199
    %1219 = vmatprep.subr.bf16.mxu0 0
    %1220 = vmatpush1.bf16.msra.mxu0 %v1198
    %1221 = vmatprep.subr.bf16.mxu0 0
    %1222 = vmatpush1.bf16.msra.mxu0 %v1197
    %1223 = vmatprep.subr.bf16.mxu0 0
    %1224 = vmatpush1.bf16.msra.mxu0 %v1196
    %1225 = vmatprep.subr.bf16.mxu0 0
    %1226 = vmatpush1.bf16.msra.mxu0 %v1195
    %1227 = vmatprep.subr.bf16.mxu0 0
    %1228 = vmatpush2.bf16.msra.mxu0 0
    %1229 = vmatprep.subr.bf16.mxu0 0
    %1230 = vmatpush2.bf16.msra.mxu0 0
    %1231 = vmatprep.subr.bf16.mxu0 0
    %1232 = vmatpush2.bf16.msra.mxu0 0
    %1233 = vmatprep.subr.bf16.mxu0 0
    %1234 = vmatpush2.bf16.msra.mxu0 0
    %1235 = vmatprep.subr.bf16.mxu0 0
    %1236 = vmatpush2.bf16.msra.mxu0 0
    %1237 = vmatprep.subr.bf16.mxu0 0
    %1238 = vmatpush2.bf16.msra.mxu0 0
    %1239 = vmatprep.subr.bf16.mxu0 0
    %1240 = vmatpush2.bf16.msra.mxu0 0
    %1241 = vmatprep.subr.bf16.mxu0 0
    %1242 = vmatpush2.bf16.msra.mxu0 0
    %1243 = vmatprep.mubr.bf16.mxu0 0
    %1244 = vmatmul.mubr.bf16.gmra.mxu0 %v775
    %v1245 = vpop.f32.mrf.mxu0
    %v1246 = vadd.f32 %v1161, %v1245
    %v1247 = vpop.f32.mrf.mxu0
    %v1248 = vpop.f32.mrf.mxu0
    %v1249 = vadd.f32 %v1161, %v1248
    %v1250 = vpop.f32.mrf.mxu0
    %1251 = vdwg.mxu0
    %v1252 = vadd.f32 %v1138, %v1246
    %v1253 = vadd.f32 %v1139, %v1249
    %v1254 = vmax.f32 %v1252, 0.0
    %v1255 = vmax.f32 %v1253, 0.0
    %v1256 = vpack.c.bf16 %v1254, %v1254
    %v1257 = vpack.c.bf16 %v1255, %v1255
    %v1258 = vld [vmem:[#allocation13] sm:$0xf]
    %v1259 = vld [vmem:[#allocation13 + $0x4] sm:$0xf]
    %v1260 = vld [vmem:[#allocation13 + $0x8] sm:$0xf]
    %v1261 = vld [vmem:[#allocation13 + $0xc] sm:$0xf]
    %v1262 = vld [vmem:[#allocation13 + $0x10] sm:$0xf]
    %v1263 = vld [vmem:[#allocation13 + $0x14] sm:$0xf]
    %v1264 = vld [vmem:[#allocation13 + $0x18] sm:$0xf]
    %v1265 = vld [vmem:[#allocation13 + $0x1c] sm:$0xf]
    %v1266 = vld [vmem:[#allocation13 + $0x20] sm:$0xf]
    %v1267 = vld [vmem:[#allocation13 + $0x24] sm:$0xf]
    %v1268 = vld [vmem:[#allocation13 + $0x28] sm:$0xf]
    %v1269 = vld [vmem:[#allocation13 + $0x2c] sm:$0xf]
    %v1270 = vld [vmem:[#allocation13 + $0x30] sm:$0xf]
    %v1271 = vld [vmem:[#allocation13 + $0x34] sm:$0xf]
    %v1272 = vld [vmem:[#allocation13 + $0x38] sm:$0xf]
    %v1273 = vld [vmem:[#allocation13 + $0x3c] sm:$0xf]
    %v1274 = vld [vmem:[%s15] sm:$0x1]
    %v1276 = vlaneseq
    %v1277 = vshrl.u32 %v1276, 7
    %v1278 = vsub.s32 0, %v1277
    %v1279 = vrot.slane %v1274, %v1278
    %v1283 = vunpack.c.l.b16 %v1256
    %v1284 = vunpack.c.l.b16 %v1257
    %v1285 = vrot.slane %v1283, 7
    %v1286 = vrot.slane %v1284, 6
    %vm1287 = vcmask 1041409
    %v1288 = vsel %vm1287, %v1286, %v1285
    %v1289 = vpack.c.b16 %v1288, %v1288
    %v1307 = vunpack.c.l.b16 %v1258
    %v1308 = vunpack.c.l.b16 %v1259
    %v1309 = vunpack.c.l.b16 %v1260
    %v1310 = vunpack.c.l.b16 %v1261
    %v1311 = vunpack.c.l.b16 %v1262
    %v1312 = vunpack.c.l.b16 %v1263
    %v1313 = vunpack.c.l.b16 %v1264
    %v1314 = vunpack.c.l.b16 %v1265
    %v1315 = vunpack.c.l.b16 %v1266
    %v1316 = vunpack.c.l.b16 %v1267
    %v1317 = vunpack.c.l.b16 %v1268
    %v1318 = vunpack.c.l.b16 %v1269
    %v1319 = vunpack.c.l.b16 %v1270
    %v1320 = vunpack.c.l.b16 %v1271
    %v1321 = vunpack.c.l.b16 %v1272
    %v1322 = vunpack.c.l.b16 %v1273
    %v1323 = vpack.c.b16 %v1308, %v1307
    %v1324 = vpack.c.b16 %v1310, %v1309
    %v1325 = vpack.c.b16 %v1312, %v1311
    %v1326 = vpack.c.b16 %v1314, %v1313
    %v1327 = vpack.c.b16 %v1316, %v1315
    %v1328 = vpack.c.b16 %v1318, %v1317
    %v1329 = vpack.c.b16 %v1320, %v1319
    %v1330 = vpack.c.b16 %v1322, %v1321
    %1339 = vmatprep.subr.bf16.mxu0 0
    %1340 = vmatpush1.bf16.msra.mxu0 %v1330
    %1341 = vmatprep.subr.bf16.mxu0 0
    %1342 = vmatpush1.bf16.msra.mxu0 %v1329
    %1343 = vmatprep.subr.bf16.mxu0 0
    %1344 = vmatpush1.bf16.msra.mxu0 %v1328
    %1345 = vmatprep.subr.bf16.mxu0 0
    %1346 = vmatpush1.bf16.msra.mxu0 %v1327
    %1347 = vmatprep.subr.bf16.mxu0 0
    %1348 = vmatpush1.bf16.msra.mxu0 %v1326
    %1349 = vmatprep.subr.bf16.mxu0 0
    %1350 = vmatpush1.bf16.msra.mxu0 %v1325
    %1351 = vmatprep.subr.bf16.mxu0 0
    %1352 = vmatpush1.bf16.msra.mxu0 %v1324
    %1353 = vmatprep.subr.bf16.mxu0 0
    %1354 = vmatpush1.bf16.msra.mxu0 %v1323
    %1355 = vmatprep.subr.bf16.mxu0 0
    %1356 = vmatpush2.bf16.msra.mxu0 0
    %1357 = vmatprep.subr.bf16.mxu0 0
    %1358 = vmatpush2.bf16.msra.mxu0 0
    %1359 = vmatprep.subr.bf16.mxu0 0
    %1360 = vmatpush2.bf16.msra.mxu0 0
    %1361 = vmatprep.subr.bf16.mxu0 0
    %1362 = vmatpush2.bf16.msra.mxu0 0
    %1363 = vmatprep.subr.bf16.mxu0 0
    %1364 = vmatpush2.bf16.msra.mxu0 0
    %1365 = vmatprep.subr.bf16.mxu0 0
    %1366 = vmatpush2.bf16.msra.mxu0 0
    %1367 = vmatprep.subr.bf16.mxu0 0
    %1368 = vmatpush2.bf16.msra.mxu0 0
    %1369 = vmatprep.subr.bf16.mxu0 0
    %1370 = vmatpush2.bf16.msra.mxu0 0
    %1371 = vmatprep.mubr.bf16.mxu0 0
    %1372 = vmatmul.mubr.bf16.gmra.mxu0 %v1289
    %v1373 = vpop.f32.mrf.mxu0
    %v1374 = vadd.f32 %v1279, %v1373
    %v1375 = vpop.f32.mrf.mxu0
    %v1376 = vpop.f32.mrf.mxu0
    %v1377 = vpop.f32.mrf.mxu0
    %1378 = vdwg.mxu0
    %1379 = vst [vmem:[#allocation14] sm:$0x3] %v1374
    // Predicated region
    $region94: #{tpu_custom_call.1} parent=1 // pred_check
      _
    $region95: #{tpu_custom_call.1} parent=1 // pred_check_branch
      %1381 = sbr.rel (0) target = $region97
    $region96: #{tpu_custom_call.1} parent=1 // pred_region
      %s1383 = ssub.s32 32, 32
      %1384 = vsyncadd [#allocation4], %s1383
      %s1386 = sshll.u32 [#allocation14], 4
      %s1387 = int_to_ptr.vmem [resolvable:$true] %s1386
      %1389 = dma.vmem_to_hbm [thread:$0]  %s1387, 32, %s16, [#allocation4]
    $region97: #{tpu_custom_call.1} parent=1 // pred_fallthru
      _
    // Predicated region
    $region98: #{tpu_custom_call.1} parent=1 // pred_check
      _
    $region99: #{tpu_custom_call.1} parent=1 // pred_check_branch
      %1391 = sbr.rel (0) target = $region101
    $region100: #{tpu_custom_call.1} parent=1 // pred_region
      %1392 = dma.done [#allocation4], 32
    $region101: #{tpu_custom_call.1} parent=1 // pred_fallthru
      _
    %1393 = vsyncpa [#allocation3], 1
    %1394 = vsyncpa [#allocation6], 1
    %1395 = vsyncpa [#allocation9], 1
    %1396 = vsyncpa [#allocation12], 1
    %1397 = vsyncpa [#allocation4], 1

</llo_original>
